<compile_context>
chip_gen: v7x
topology: tpu7x:2x2x1
jax: 0.10.0
libtpu: 0.0.40
codegen_flags: <defaults>
</compile_context>

<pallas_src>
import functools
import math

import jax
import jax.numpy as jnp
from jax.experimental import pallas as pl
from jax.experimental.pallas import tpu as pltpu


def gcn2_kernel(adj_ref, x_ref, h0_ref, w_ref, *rest, alpha, residual):
    """Fused GCNII forward (variant=False), identity-skip folded into W.

    Grid: (N // tm, N // tk).  Axis 0 ("parallel") tiles rows of adj / output
    (megacore-shardable); axis 1 ("arbitrary") tiles the adj @ x contraction,
    accumulated into the per-row-tile f32 scratch `hi_acc`.  The alpha-mix with
    h0, the single matmul support @ (theta*W + (1-theta)*I) and the optional
    residual add are done once, on the last k step.
    """
    if residual:
        xres_ref, o_ref, hi_acc = rest
    else:
        o_ref, hi_acc = rest

    k = pl.program_id(1)

    @pl.when(k == 0)
    def _init():
        hi_acc[...] = jnp.zeros_like(hi_acc)

    # hi += adj[i-tile, k-tile] @ x[k-tile, :]   (f32 accumulation on the MXU)
    hi_acc[...] += jnp.dot(
        adj_ref[...], x_ref[...], preferred_element_type=jnp.float32
    )

    @pl.when(k == pl.num_programs(1) - 1)
    def _finish():
        support = (1.0 - alpha) * hi_acc[...] + alpha * h0_ref[...].astype(jnp.float32)
        # theta*(support @ W) + (1-theta)*support  ==  support @ W_eff
        out = jnp.dot(
            support.astype(w_ref.dtype), w_ref[...],
            preferred_element_type=jnp.float32,
        )
        if residual:
            out = out + xres_ref[...].astype(jnp.float32)
        o_ref[...] = out.astype(o_ref.dtype)


def _pick_tile(n, target, multiple):
    """Largest divisor of n that is <= target and a multiple of `multiple`;
    falls back to the full dimension (always layout-legal)."""
    t = min(target, n)
    if t >= n:
        return n
    for cand in range(t, 0, -1):
        if n % cand == 0 and cand % multiple == 0:
            return cand
    return n


def graph_convolution2(
    x, adj, h0, weight, *, lamda, alpha, l,
    residual=False, compute_dtype=jnp.bfloat16, tm=1024, tk=1024, adj_buffers=3,
):
    """Pallas GCNII layer: support @ (theta*W + (1-theta)*I), support = (1-a)*adj@x + a*h0."""
    n, d = x.shape
    d_in, d_out = weight.shape
    assert adj.shape == (n, n)
    assert h0.shape == (n, d)
    # variant=False requires in_features == out_features for the identity skip.
    assert d_in == d and d_out == d

    theta = math.log(lamda / l + 1.0)
    out_dtype = x.dtype

    # Fold the (1 - theta) identity skip into the weight (free: W is only D x D).
    w_eff = (theta * weight.astype(jnp.float32)
             + (1.0 - theta) * jnp.eye(d, dtype=jnp.float32))

    # Low-precision storage of the streamed operands; f32 accumulation in-kernel.
    if compute_dtype is not None:
        adj_s = adj.astype(compute_dtype)
        x_s = x.astype(compute_dtype)
        h0_s = h0.astype(compute_dtype)
        w_s = w_eff.astype(compute_dtype)
    else:
        adj_s, x_s, h0_s, w_s = adj, x, h0, w_eff

    # Tile selection: big tiles for DMA efficiency / fewer grid steps, but keep
    # >= 2 row tiles so both v7x TensorCores get work along the "parallel" axis.
    tm_target = min(tm, max(n // 2, 8))
    tm = _pick_tile(n, tm_target, 8)       # sublane dim only -> multiple of 8
    tk = _pick_tile(n, min(tk, n), 128)    # lane dim of adj tile -> multiple of 128
    assert n % tm == 0 and n % tk == 0
    grid = (n // tm, n // tk)

    # Generation-aware VMEM budget (no double-counting of the double buffer).
    try:
        vmem_cap = int(pltpu.get_tpu_info().vmem_capacity_bytes)
    except Exception:
        vmem_cap = 64 << 20  # v7x-safe fallback
    ea = jnp.dtype(adj_s.dtype).itemsize
    ex = jnp.dtype(x_s.dtype).itemsize
    eo = jnp.dtype(out_dtype).itemsize
    need = (max(adj_buffers, 2) * tm * tk * ea   # adj stream (multi-buffered)
            + 2 * tk * d * ex                    # x contraction tile
            + 2 * tm * d * ex                    # h0 row tile
            + d * d * ex                         # folded weight (resident)
            + 2 * tm * d * eo                    # output tile
            + tm * d * 4)                        # f32 hi accumulator
    if residual:
        need += 2 * tm * d * jnp.dtype(x.dtype).itemsize
    vmem_limit = int(min(max(need + (8 << 20), 32 << 20), (3 * vmem_cap) // 4))

    kernel = functools.partial(
        gcn2_kernel, alpha=float(alpha), residual=bool(residual)
    )

    def build_call(a_spec):
        in_specs = [
            a_spec,                                           # adj (i, k) tile
            pl.BlockSpec((tk, d), lambda i, k: (k, 0)),       # x contraction tile
            pl.BlockSpec((tm, d), lambda i, k: (i, 0)),       # h0 row tile
            pl.BlockSpec((d, d), lambda i, k: (0, 0)),        # folded weight
        ]
        operands = [adj_s, x_s, h0_s, w_s]
        if residual:
            in_specs.append(pl.BlockSpec((tm, d), lambda i, k: (i, 0)))
            operands.append(x)                                # fused residual add
        call = pl.pallas_call(
            kernel,
            out_shape=jax.ShapeDtypeStruct((n, d), out_dtype),
            grid_spec=pltpu.PrefetchScalarGridSpec(
                num_scalar_prefetch=0,
                grid=grid,
                in_specs=in_specs,
                out_specs=pl.BlockSpec((tm, d), lambda i, k: (i, 0)),
                scratch_shapes=[pltpu.VMEM((tm, d), jnp.float32)],
            ),
            compiler_params=pltpu.CompilerParams(
                dimension_semantics=("parallel", "arbitrary"),
                vmem_limit_bytes=vmem_limit,
            ),
        )
        return call, operands

    # adj spec candidates: triple-buffered first (hide the stream under the
    # longer last-k step), plain double-buffered fallback.
    spec_candidates = []
    if adj_buffers and adj_buffers > 2:
        try:
            spec_candidates.append(
                pl.BlockSpec((tm, tk), lambda i, k: (i, k),
                             pipeline_mode=pl.Buffered(adj_buffers))
            )
        except Exception:
            pass
    spec_candidates.append(pl.BlockSpec((tm, tk), lambda i, k: (i, k)))

    err = None
    for a_spec in spec_candidates:
        call, operands = build_call(a_spec)
        try:
            return call(*operands)
        except Exception as e:   # fall back to default double buffering
            err = e
    raise err


if __name__ == "__main__":
    # Small, tile-friendly shapes consistent with the module's semantics
    # (GCNII hidden layer: in_features == out_features).
    N, D = 512, 128
    LAMDA, ALPHA, L = 0.5, 0.1, 1

    key = jax.random.PRNGKey(0)
    kx, kh0, kadj, kw = jax.random.split(key, 4)

    # reset_parameters(): uniform(-stdv, stdv), stdv = 1/sqrt(out_features).
    stdv = 1.0 / math.sqrt(D)
    weight = jax.random.uniform(
        kw, (D, D), dtype=jnp.float32, minval=-stdv, maxval=stdv
    )
    x = jax.random.normal(kx, (N, D), dtype=jnp.float32)     # layer input
    h0 = jax.random.normal(kh0, (N, D), dtype=jnp.float32)   # initial residual

    # Dense, row-normalized adjacency (stand-in for the sparse spmm operand).
    adj = (jax.random.uniform(kadj, (N, N)) < 0.1).astype(jnp.float32)
    adj = adj + jnp.eye(N, dtype=jnp.float32)
    adj = adj / jnp.sum(adj, axis=1, keepdims=True)

    # Pure-JAX reference of the torch forward (variant=False).
    theta = math.log(LAMDA / L + 1.0)
    hi = adj @ x
    support = (1.0 - ALPHA) * hi + ALPHA * h0
    ref = theta * (support @ weight) + (1.0 - theta) * support

    # 1) f32 storage path: tight validation of kernel structure + W-fold.
    out_f32 = graph_convolution2(
        x, adj, h0, weight, lamda=LAMDA, alpha=ALPHA, l=L, compute_dtype=None
    )
    out_f32 = jax.block_until_ready(out_f32)
    assert out_f32.shape == (N, D)
    assert jnp.allclose(out_f32, ref, atol=2e-4, rtol=2e-4), "f32 mismatch vs reference"

    # 2) Default bf16-storage path (f32 accumulation in-kernel): loose tolerance.
    out_bf16 = graph_convolution2(x, adj, h0, weight, lamda=LAMDA, alpha=ALPHA, l=L)
    out_bf16 = jax.block_until_ready(out_bf16)
    rel = jnp.max(jnp.abs(out_bf16 - ref)) / (jnp.max(jnp.abs(ref)) + 1e-12)
    assert float(rel) < 2e-2, f"bf16 path relative error too large: {float(rel)}"

    # 3) residual=True path (residual add fused into the kernel epilogue).
    out_res = graph_convolution2(
        x, adj, h0, weight, lamda=LAMDA, alpha=ALPHA, l=L, residual=True
    )
    out_res = jax.block_until_ready(out_res)
    ref_res = ref + x
    rel_r = jnp.max(jnp.abs(out_res - ref_res)) / (jnp.max(jnp.abs(ref_res)) + 1e-12)
    assert float(rel_r) < 2e-2, f"residual path relative error too large: {float(rel_r)}"

    print("KERNEL_OK")
</pallas_src>

<mosaic_0001>
module attributes {stable_mosaic.version = 11 : i64} {
  func.func @gcn2_kernel(%arg0: i32, %arg1: i32, %arg2: memref<256x512xf32, #tpu.memory_space<vmem>>, %arg3: memref<512x128xf32, #tpu.memory_space<vmem>>, %arg4: memref<256x128xf32, #tpu.memory_space<vmem>>, %arg5: memref<128x128xf32, #tpu.memory_space<vmem>>, %arg6: memref<256x128xf32, #tpu.memory_space<vmem>>, %arg7: memref<256x128xf32, #tpu.memory_space<vmem>>) attributes {dimension_semantics = [#tpu.dimension_semantics<parallel>, #tpu.dimension_semantics<arbitrary>], iteration_bounds = array<i64: 2, 1>, scalar_prefetch = 0 : i64, scratch_operands = 1 : i64, tpu.core_type = #tpu.core_type<tc>, window_params = [{transform_indices = @transform_0, window_bounds = array<i64: 256, 512>}, {transform_indices = @transform_1, window_bounds = array<i64: 512, 128>}, {transform_indices = @transform_2, window_bounds = array<i64: 256, 128>}, {pipeline_mode = #tpu.pipeline_mode<synchronous>, transform_indices = @transform_3, window_bounds = array<i64: 128, 128>}, {transform_indices = @transform_4, window_bounds = array<i64: 256, 128>}]} {
    %c0_i32 = arith.constant 0 : i32
    %0 = arith.cmpi eq, %arg1, %c0_i32 : i32
    %1 = arith.extui %0 : i1 to i32
    %c0_i32_0 = arith.constant 0 : i32
    %2 = arith.cmpi ne, %1, %c0_i32_0 : i32
    scf.if %2 {
      %cst_10 = arith.constant 0.000000e+00 : f32
      %12 = vector.broadcast %cst_10 : f32 to vector<256x128xf32>
      %c0_11 = arith.constant 0 : index
      %c0_12 = arith.constant 0 : index
      %13 = vector.load %arg7[%c0_11, %c0_12] : memref<256x128xf32, #tpu.memory_space<vmem>>, vector<256x128xf32>
      tpu.vector_store %arg7[%c0_11, %c0_12], %12 {strides = array<i32>} : memref<256x128xf32, #tpu.memory_space<vmem>>, vector<256x128xf32>,
    } else {
    }
    %c0 = arith.constant 0 : index
    %c0_1 = arith.constant 0 : index
    %3 = vector.load %arg7[%c0, %c0_1] : memref<256x128xf32, #tpu.memory_space<vmem>>, vector<256x128xf32>
    %c0_2 = arith.constant 0 : index
    %c0_3 = arith.constant 0 : index
    %4 = vector.load %arg2[%c0_2, %c0_3] : memref<256x512xf32, #tpu.memory_space<vmem>>, vector<256x512xf32>
    %c0_4 = arith.constant 0 : index
    %c0_5 = arith.constant 0 : index
    %5 = vector.load %arg3[%c0_4, %c0_5] : memref<512x128xf32, #tpu.memory_space<vmem>>, vector<512x128xf32>
    %cst = arith.constant dense<0.000000e+00> : vector<256x128xf32>
    %6 = tpu.matmul %4, %5, %cst {dimension_numbers = #tpu.dot_dimension_numbers<[1], [0], [0], [1], [0, 0, 1, 1], [], []>} : vector<256x512xf32>, vector<512x128xf32>, vector<256x128xf32> -> vector<256x128xf32>
    %7 = arith.addf %3, %6 : vector<256x128xf32>
    %c0_6 = arith.constant 0 : index
    %c0_7 = arith.constant 0 : index
    %8 = vector.load %arg7[%c0_6, %c0_7] : memref<256x128xf32, #tpu.memory_space<vmem>>, vector<256x128xf32>
    tpu.vector_store %arg7[%c0_6, %c0_7], %7 {strides = array<i32>} : memref<256x128xf32, #tpu.memory_space<vmem>>, vector<256x128xf32>,
    %c0_i32_8 = arith.constant 0 : i32
    %9 = arith.cmpi eq, %arg1, %c0_i32_8 : i32
    %10 = arith.extui %9 : i1 to i32
    %c0_i32_9 = arith.constant 0 : i32
    %11 = arith.cmpi ne, %10, %c0_i32_9 : i32
    scf.if %11 {
      %c0_10 = arith.constant 0 : index
      %c0_11 = arith.constant 0 : index
      %12 = vector.load %arg7[%c0_10, %c0_11] : memref<256x128xf32, #tpu.memory_space<vmem>>, vector<256x128xf32>
      %cst_12 = arith.constant 0.899999976 : f32
      %13 = vector.broadcast %cst_12 : f32 to vector<256x128xf32>
      %14 = arith.mulf %13, %12 : vector<256x128xf32>
      %c0_13 = arith.constant 0 : index
      %c0_14 = arith.constant 0 : index
      %15 = vector.load %arg4[%c0_13, %c0_14] : memref<256x128xf32, #tpu.memory_space<vmem>>, vector<256x128xf32>
      %cst_15 = arith.constant 1.000000e-01 : f32
      %16 = vector.broadcast %cst_15 : f32 to vector<256x128xf32>
      %17 = arith.mulf %16, %15 : vector<256x128xf32>
      %18 = arith.addf %14, %17 : vector<256x128xf32>
      %c0_16 = arith.constant 0 : index
      %c0_17 = arith.constant 0 : index
      %19 = vector.load %arg5[%c0_16, %c0_17] : memref<128x128xf32, #tpu.memory_space<vmem>>, vector<128x128xf32>
      %cst_18 = arith.constant dense<0.000000e+00> : vector<256x128xf32>
      %20 = tpu.matmul %18, %19, %cst_18 {dimension_numbers = #tpu.dot_dimension_numbers<[1], [0], [0], [1], [0, 0, 1, 1], [], []>} : vector<256x128xf32>, vector<128x128xf32>, vector<256x128xf32> -> vector<256x128xf32>
      %c0_19 = arith.constant 0 : index
      %c0_20 = arith.constant 0 : index
      %21 = vector.load %arg6[%c0_19, %c0_20] : memref<256x128xf32, #tpu.memory_space<vmem>>, vector<256x128xf32>
      tpu.vector_store %arg6[%c0_19, %c0_20], %20 {strides = array<i32>} : memref<256x128xf32, #tpu.memory_space<vmem>>, vector<256x128xf32>,
    } else {
    }
    return
  }
  func.func @transform_0(%arg0: i32, %arg1: i32) -> (i32, i32) {
    %c0_i32 = arith.constant 0 : i32
    return %arg0, %arg1 : i32, i32
  }
  func.func @transform_1(%arg0: i32, %arg1: i32) -> (i32, i32) {
    %c0_i32 = arith.constant 0 : i32
    %c0_i32_0 = arith.constant 0 : i32
    return %arg1, %c0_i32 : i32, i32
  }
  func.func @transform_2(%arg0: i32, %arg1: i32) -> (i32, i32) {
    %c0_i32 = arith.constant 0 : i32
    %c0_i32_0 = arith.constant 0 : i32
    return %arg0, %c0_i32 : i32, i32
  }
  func.func @transform_3(%arg0: i32, %arg1: i32) -> (i32, i32) {
    %c0_i32 = arith.constant 0 : i32
    %c0_i32_0 = arith.constant 0 : i32
    %c0_i32_1 = arith.constant 0 : i32
    return %c0_i32, %c0_i32_0 : i32, i32
  }
  func.func @transform_4(%arg0: i32, %arg1: i32) -> (i32, i32) {
    %c0_i32 = arith.constant 0 : i32
    %c0_i32_0 = arith.constant 0 : i32
    return %arg0, %c0_i32 : i32, i32
  }
}

</mosaic_0001>

<llo_original>
// kernel: tpu_custom_call.1
$region0: #{tpu_custom_call.1}
  #allocation0 [shape = 'u32[]', space=smem, size = 0x4, offset = 0x4, fixed_abs, tag = 'smem constant byte address 0x4 - core index']
  #allocation1 [shape = 'u32[144,128]{1,0:T(1,128)}', space=vmem, size = 0x12000, scoped, tag = 'internal scratch']
  #allocation2 [shape = 'f32[256,128]{1,0:T(8,128)}', space=vmem, size = 0x20000, scoped, tag = 'scratch operand']
  %s0 = inlined_call_operand.hbm [shape: f32[512,512], index: 0, kind: input, shape index: {}]
  %s1 = inlined_call_operand.hbm [shape: f32[512,128], index: 1, kind: input, shape index: {}]
  %s2 = inlined_call_operand.hbm [shape: f32[512,128], index: 2, kind: input, shape index: {}]
  %s3 = inlined_call_operand.hbm [shape: f32[128,128], index: 3, kind: input, shape index: {}]
  %s4 = inlined_call_operand.hbm [shape: f32[512,128], index: 4, kind: output, shape index: {}]
  %s5 = sld [smem:[#allocation0]]
  $region73: #{tpu_custom_call.1} parent=0
    _
  %s7 = ssub.s32 1, %s5
  %s8 = scalar_select 0, %s7, %s5
  $region1: #{tpu_custom_call.1} parent=0
    #allocation3 [shape = 'u8[1048576]{0}', space=vmem, size = 0x100000, scoped, tag = 'input window, operand 0']
    #allocation4 [shape = 's32[2]{0}', space=sflag, size = 0x8, scoped, tag = 'scoped memory for tpu_custom_call.1']
    #allocation5 [shape = 's32[2]{0}', space=sflag, size = 0x8, scoped, tag = 'scoped memory for tpu_custom_call.1']
    #allocation6 [shape = 'u8[262144]{0}', space=vmem, size = 0x40000, scoped, tag = 'input window, operand 1, single buffered']
    #allocation7 [shape = 's32[1]{0}', space=sflag, size = 0x4, scoped, tag = 'scoped memory for tpu_custom_call.1']
    #allocation8 [shape = 'u8[262144]{0}', space=vmem, size = 0x40000, scoped, tag = 'input window, operand 2']
    #allocation9 [shape = 'u8[65536]{0}', space=vmem, size = 0x10000, scoped, tag = 'input window, operand 3, single buffered']
    #allocation10 [shape = 'u8[262144]{0}', space=vmem, size = 0x40000, scoped, tag = 'output window, operand 0']
    %9 = vsyncpa [#allocation4], 0
    %s10 = scalar_lea.sflag [#allocation4], 1
    %11 = vsyncpa %s10, 0
    %12 = vsyncpa [#allocation7], 0
    %13 = vsyncpa [#allocation5], 0
    %s14 = scalar_lea.sflag [#allocation5], 1
    %15 = vsyncpa %s14, 0
    loop: start=0, step=1, limit=4
    $region2: #{tpu_custom_call.1} parent=1 // loop_pre_header
      _
    $region3: #{tpu_custom_call.1} parent=1 // loop_header
      %s17 = sphi 0, %s21
      %p18 = scmp.ge.s32.totalorder %s17, 4
      %s24 = sphi 0, %s36
      %s25 = sphi 0, %s32
      %s26 = sphi 0, %s24
      %s27 = sphi 0, %s25
      %s28 = sphi 0, %s26
      %s29 = sphi 0, %s27
      %s41 = sphi 0, %s43
      %s44 = sphi 0, %s41
      %s45 = sphi 0, %s44
      %s61 = sphi 0, %s45
      %s67 = sphi 0, %s69
      %s70 = sphi 0, %s67
      %s71 = sphi 0, %s70
      %s87 = sphi 0, %s71
      %s93 = sphi 0, %s95
      %s96 = sphi 0, %s93
      %s97 = sphi 0, %s96
      %s113 = sphi 0, %s97
      %s117 = sphi 0, %s117
      %s119 = sphi 0, %s117
      %s120 = sphi 0, %s119
      %s134 = sphi 0, %s120
      %s140 = sphi 0, %s142
      %s143 = sphi 0, %s140
      %s144 = sphi 0, %s143
      %s160 = sphi 0, %s144
    $region4: #{tpu_custom_call.1} parent=1 // loop_header_branch
      %20 = sbr.rel (%p18) target = $region8
    $region5: #{tpu_custom_call.1} parent=1 // loop_body
      %s22 = ssub.s32 %s17, 1
      %s23 = ssub.s32 %s17, 2
      %s30 = sadd.s32 1, %s25
      %p31 = scmp.ge.s32.totalorder %s30, 1
      %s32 = scalar_select %p31, 0, %s30
      %s33 = sadd.s32 1, %s24
      %s34 = scalar_select %p31, %s33, %s24
      %p35 = scmp.ge.s32.totalorder %s34, 2
      %s36 = scalar_select %p35, 0, %s34
      %s37 = ssub.s32 %s24, %s36
      %s38 = ssub.s32 %s25, %s32
      %s39 = sor.u32 %s37, %s38
      %p40 = scmp.eq.s32.totalorder %s39, 0
      %s42 = sadd.s32 %s41, 1
      %s43 = scalar_select %p40, %s41, %s42
      %p46 = pneg %p40
      %p47 = scmp.eq.s32.totalorder %s17, 1
      %p48 = por %p46, %p47
      %p49 = scmp.ne.s32.totalorder %s41, %s44
      %p50 = scmp.eq.s32.totalorder %s17, 0
      %p51 = por %p49, %p50
      %p52 = scmp.ne.s32.totalorder %s41, %s44
      %p53 = scmp.eq.s32.totalorder %s22, 1
      %p54 = por %p52, %p53
      %p55 = scmp.ne.s32.totalorder %s44, %s45
      %p56 = scmp.eq.s32.totalorder %s22, 0
      %p57 = por %p55, %p56
      %p58 = scmp.ne.s32.totalorder %s44, %s45
      %p59 = scmp.eq.s32.totalorder %s23, 1
      %p60 = por %p58, %p59
      %p62 = scmp.ne.s32.totalorder %s45, %s61
      %p63 = scmp.eq.s32.totalorder %s23, 0
      %p64 = por %p62, %p63
      %s65 = ssub.s32 %s25, %s32
      %p66 = scmp.eq.s32.totalorder %s65, 0
      %s68 = sadd.s32 %s67, 1
      %s69 = scalar_select %p66, %s67, %s68
      %p72 = pneg %p66
      %p73 = scmp.eq.s32.totalorder %s17, 1
      %p74 = por %p72, %p73
      %p75 = scmp.ne.s32.totalorder %s67, %s70
      %p76 = scmp.eq.s32.totalorder %s17, 0
      %p77 = por %p75, %p76
      %p78 = scmp.ne.s32.totalorder %s67, %s70
      %p79 = scmp.eq.s32.totalorder %s22, 1
      %p80 = por %p78, %p79
      %p81 = scmp.ne.s32.totalorder %s70, %s71
      %p82 = scmp.eq.s32.totalorder %s22, 0
      %p83 = por %p81, %p82
      %p84 = scmp.ne.s32.totalorder %s70, %s71
      %p85 = scmp.eq.s32.totalorder %s23, 1
      %p86 = por %p84, %p85
      %p88 = scmp.ne.s32.totalorder %s71, %s87
      %p89 = scmp.eq.s32.totalorder %s23, 0
      %p90 = por %p88, %p89
      %s91 = ssub.s32 %s24, %s36
      %p92 = scmp.eq.s32.totalorder %s91, 0
      %s94 = sadd.s32 %s93, 1
      %s95 = scalar_select %p92, %s93, %s94
      %p98 = pneg %p92
      %p99 = scmp.eq.s32.totalorder %s17, 1
      %p100 = por %p98, %p99
      %p101 = scmp.ne.s32.totalorder %s93, %s96
      %p102 = scmp.eq.s32.totalorder %s17, 0
      %p103 = por %p101, %p102
      %p104 = scmp.ne.s32.totalorder %s93, %s96
      %p105 = scmp.eq.s32.totalorder %s22, 1
      %p106 = por %p104, %p105
      %p107 = scmp.ne.s32.totalorder %s96, %s97
      %p108 = scmp.eq.s32.totalorder %s22, 0
      %p109 = por %p107, %p108
      %p110 = scmp.ne.s32.totalorder %s96, %s97
      %p111 = scmp.eq.s32.totalorder %s23, 1
      %p112 = por %p110, %p111
      %p114 = scmp.ne.s32.totalorder %s97, %s113
      %p115 = scmp.eq.s32.totalorder %s23, 0
      %p116 = por %p114, %p115
      %s118 = sadd.s32 %s117, 1
      %p121 = scmp.eq.s32.totalorder %s17, 1
      %p122 = scmp.ne.s32.totalorder %s117, %s119
      %p123 = scmp.eq.s32.totalorder %s17, 0
      %p124 = por %p122, %p123
      %p125 = scmp.ne.s32.totalorder %s117, %s119
      %p126 = scmp.eq.s32.totalorder %s22, 1
      %p127 = por %p125, %p126
      %p128 = scmp.ne.s32.totalorder %s119, %s120
      %p129 = scmp.eq.s32.totalorder %s22, 0
      %p130 = por %p128, %p129
      %p131 = scmp.ne.s32.totalorder %s119, %s120
      %p132 = scmp.eq.s32.totalorder %s23, 1
      %p133 = por %p131, %p132
      %p135 = scmp.ne.s32.totalorder %s120, %s134
      %p136 = scmp.eq.s32.totalorder %s23, 0
      %p137 = por %p135, %p136
      %s138 = ssub.s32 %s24, %s36
      %p139 = scmp.eq.s32.totalorder %s138, 0
      %s141 = sadd.s32 %s140, 1
      %s142 = scalar_select %p139, %s140, %s141
      %p145 = pneg %p139
      %p146 = scmp.eq.s32.totalorder %s17, 1
      %p147 = por %p145, %p146
      %p148 = scmp.ne.s32.totalorder %s140, %s143
      %p149 = scmp.eq.s32.totalorder %s17, 0
      %p150 = por %p148, %p149
      %p151 = scmp.ne.s32.totalorder %s140, %s143
      %p152 = scmp.eq.s32.totalorder %s22, 1
      %p153 = por %p151, %p152
      %p154 = scmp.ne.s32.totalorder %s143, %s144
      %p155 = scmp.eq.s32.totalorder %s22, 0
      %p156 = por %p154, %p155
      %p157 = scmp.ne.s32.totalorder %s143, %s144
      %p158 = scmp.eq.s32.totalorder %s23, 1
      %p159 = por %p157, %p158
      %p161 = scmp.ne.s32.totalorder %s144, %s160
      %p162 = scmp.eq.s32.totalorder %s23, 0
      %p163 = por %p161, %p162
      %p164 = scmp.le.s32.totalorder 1, %s17
      %p165 = scmp.lt.s32.totalorder %s17, 3
      %p166 = pnand %p164, %p165
      %p167 = pneg %p166
      // Predicated region
      $region9: #{tpu_custom_call.1} parent=5 // pred_check
        _
      $region10: #{tpu_custom_call.1} parent=5 // pred_check_branch
        %169 = sbr.rel (%p166) target = $region12
      $region11: #{tpu_custom_call.1} parent=5 // pred_region
        %s170 = ssub.s32 %s17, 1
        // Predicated region
        $region13: #{tpu_custom_call.1} parent=11 // pred_check
          %p171 = pneg %p83
        $region14: #{tpu_custom_call.1} parent=11 // pred_check_branch
          %173 = sbr.rel (%p171) target = $region16
        $region15: #{tpu_custom_call.1} parent=11 // pred_region
          %s174 = smul.u32 64, %s27
          %s176 = ssub.s32 8192, 8192
          %177 = vsyncadd [#allocation7], %s176
          %s178 = smul.addr %s174, 128
          %s179 = scalar_lea.hbm %s1, %s178
          %s180 = sshll.u32 [#allocation6], 4
          %s181 = int_to_ptr.vmem [resolvable:$true] %s180
          %186 = dma.hbm_to_vmem [thread:$0]  %s179, 8192, %s181, [#allocation7], 128, 128, 8
        $region16: #{tpu_custom_call.1} parent=11 // pred_fallthru
          _
        // Predicated region
        $region17: #{tpu_custom_call.1} parent=11 // pred_check
          %p187 = pneg %p130
        $region18: #{tpu_custom_call.1} parent=11 // pred_check_branch
          %189 = sbr.rel (%p187) target = $region20
        $region19: #{tpu_custom_call.1} parent=11 // pred_region
          %s191 = ssub.s32 2048, 2048
          %192 = vsyncadd [#allocation7], %s191
          %s193 = sshll.u32 [#allocation9], 4
          %s194 = int_to_ptr.vmem [resolvable:$true] %s193
          %199 = dma.hbm_to_vmem [thread:$0]  %s3, 2048, %s194, [#allocation7], 128, 128, 8
        $region20: #{tpu_custom_call.1} parent=11 // pred_fallthru
          _
      $region12: #{tpu_custom_call.1} parent=5 // pred_fallthru
        _
      %p200 = scmp.lt.s32.totalorder %s17, 2
      // Predicated region
      $region21: #{tpu_custom_call.1} parent=5 // pred_check
        %p201 = pneg %p200
      $region22: #{tpu_custom_call.1} parent=5 // pred_check_branch
        %203 = sbr.rel (%p201) target = $region24
      $region23: #{tpu_custom_call.1} parent=5 // pred_region
        // Predicated region
        $region25: #{tpu_custom_call.1} parent=23 // pred_check
          %p204 = pneg %p51
        $region26: #{tpu_custom_call.1} parent=23 // pred_check_branch
          %206 = sbr.rel (%p204) target = $region28
        $region27: #{tpu_custom_call.1} parent=23 // pred_region
          %s207 = sand.u32 %s17, 1
          %s208 = scalar_lea.sflag [#allocation4], %s207
          %s209 = sand.u32 %s41, 1
          %s210 = smul.addr %s209, 1024
          %s211 = scalar_lea.vmem [#allocation3], %s210
          %s212 = smul.u32 32, %s24
          %s213 = smul.u32 4, %s25
          %s215 = ssub.s32 16384, 16384
          %216 = vsyncadd %s208, %s215
          %s217 = smul.addr %s212, 4
          %s218 = sadd.s32 %s213, %s217
          %s219 = smul.addr %s218, 128
          %s220 = scalar_lea.hbm %s0, %s219
          %s221 = sshll.u32 %s211, 4
          %s222 = int_to_ptr.vmem [resolvable:$true] %s221
          %227 = dma.hbm_to_vmem [thread:$0]  %s220, 16384, %s222, %s208, 512, 512, 32
        $region28: #{tpu_custom_call.1} parent=23 // pred_fallthru
          _
        // Predicated region
        $region29: #{tpu_custom_call.1} parent=23 // pred_check
          %p228 = pneg %p103
        $region30: #{tpu_custom_call.1} parent=23 // pred_check_branch
          %230 = sbr.rel (%p228) target = $region32
        $region31: #{tpu_custom_call.1} parent=23 // pred_region
          %s231 = sand.u32 %s17, 1
          %s232 = scalar_lea.sflag [#allocation4], %s231
          %s233 = sand.u32 %s93, 1
          %s234 = smul.addr %s233, 256
          %s235 = scalar_lea.vmem [#allocation8], %s234
          %s236 = smul.u32 32, %s24
          %s238 = ssub.s32 4096, 4096
          %239 = vsyncadd %s232, %s238
          %s240 = smul.addr %s236, 128
          %s241 = scalar_lea.hbm %s2, %s240
          %s242 = sshll.u32 %s235, 4
          %s243 = int_to_ptr.vmem [resolvable:$true] %s242
          %248 = dma.hbm_to_vmem [thread:$0]  %s241, 4096, %s243, %s232, 128, 128, 8
        $region32: #{tpu_custom_call.1} parent=23 // pred_fallthru
          _
      $region24: #{tpu_custom_call.1} parent=5 // pred_fallthru
        _
      %p249 = scmp.le.s32.totalorder 1, %s17
      %p250 = scmp.lt.s32.totalorder %s17, 3
      %p251 = pnand %p249, %p250
      %p252 = pneg %p251
      // Predicated region
      $region33: #{tpu_custom_call.1} parent=5 // pred_check
        _
      $region34: #{tpu_custom_call.1} parent=5 // pred_check_branch
        %254 = sbr.rel (%p251) target = $region36
      $region35: #{tpu_custom_call.1} parent=5 // pred_region
        %s255 = ssub.s32 %s17, 1
        %s256 = sand.u32 %s22, 1
        %s257 = scalar_lea.sflag [#allocation4], %s256
        %s258 = sand.u32 %s44, 1
        %s259 = smul.addr %s258, 1024
        %s260 = scalar_lea.vmem [#allocation3], %s259
        // Predicated region
        $region37: #{tpu_custom_call.1} parent=35 // pred_check
          %p261 = pneg %p57
        $region38: #{tpu_custom_call.1} parent=35 // pred_check_branch
          %263 = sbr.rel (%p261) target = $region40
        $region39: #{tpu_custom_call.1} parent=35 // pred_region
          %264 = dma.done %s257, 16384
        $region40: #{tpu_custom_call.1} parent=35 // pred_fallthru
          _
        // Predicated region
        $region41: #{tpu_custom_call.1} parent=35 // pred_check
          %p265 = pneg %p83
        $region42: #{tpu_custom_call.1} parent=35 // pred_check_branch
          %267 = sbr.rel (%p265) target = $region44
        $region43: #{tpu_custom_call.1} parent=35 // pred_region
          %268 = dma.done [#allocation7], 8192
        $region44: #{tpu_custom_call.1} parent=35 // pred_fallthru
          _
        %s269 = sand.u32 %s22, 1
        %s270 = scalar_lea.sflag [#allocation4], %s269
        %s271 = sand.u32 %s96, 1
        %s272 = smul.addr %s271, 256
        %s273 = scalar_lea.vmem [#allocation8], %s272
        // Predicated region
        $region45: #{tpu_custom_call.1} parent=35 // pred_check
          %p274 = pneg %p109
        $region46: #{tpu_custom_call.1} parent=35 // pred_check_branch
          %276 = sbr.rel (%p274) target = $region48
        $region47: #{tpu_custom_call.1} parent=35 // pred_region
          %277 = dma.done %s270, 4096
        $region48: #{tpu_custom_call.1} parent=35 // pred_fallthru
          _
        // Predicated region
        $region49: #{tpu_custom_call.1} parent=35 // pred_check
          %p278 = pneg %p130
        $region50: #{tpu_custom_call.1} parent=35 // pred_check_branch
          %280 = sbr.rel (%p278) target = $region52
        $region51: #{tpu_custom_call.1} parent=35 // pred_region
          %281 = dma.done [#allocation7], 2048
        $region52: #{tpu_custom_call.1} parent=35 // pred_fallthru
          _
        %s282 = sand.u32 %s22, 1
        %s283 = scalar_lea.sflag [#allocation4], %s282
        %s284 = sand.u32 %s44, 1
        %s285 = smul.addr %s284, 1024
        %s286 = scalar_lea.vmem [#allocation3], %s285
        %p287 = pneg %p57
        %p288 = pneg %p54
        %p289 = pneg %p83
        %p290 = pneg %p80
        %s291 = sand.u32 %s22, 1
        %s292 = scalar_lea.sflag [#allocation4], %s291
        %s293 = sand.u32 %s96, 1
        %s294 = smul.addr %s293, 256
        %s295 = scalar_lea.vmem [#allocation8], %s294
        %p296 = pneg %p109
        %p297 = pneg %p106
        %p298 = pneg %p130
        %p299 = pneg %p127
        %p300 = pneg %p156
        %p301 = pneg %p153
        %s302 = sand.u32 %s143, 1
        %s303 = scalar_lea.sflag [#allocation5], %s302
        %s304 = sand.u32 %s143, 1
        %s305 = smul.addr %s304, 256
        %s306 = scalar_lea.vmem [#allocation10], %s305
        %s307 = smul.u32 32, %s26
        %s308 = smul.u32 4, %s27
        %s309 = smul.u32 64, %s27
        %s310 = smul.u32 32, %s26
        %s311 = smul.u32 32, %s26
        %p312 = scmp.eq.s32.totalorder %s27, 0
        // Predicated region
        $region53: #{tpu_custom_call.1} parent=35 // pred_check
          %p313 = pneg %p312
        $region54: #{tpu_custom_call.1} parent=35 // pred_check_branch
          %315 = sbr.rel (%p313) target = $region56
        $region55: #{tpu_custom_call.1} parent=35 // pred_region
          %316 = vst [vmem:[#allocation2] sm:$0xff] 0.0
          %317 = vst [vmem:[#allocation2 + $0x8] sm:$0xff] 0.0
          %318 = vst [vmem:[#allocation2 + $0x10] sm:$0xff] 0.0
          %319 = vst [vmem:[#allocation2 + $0x18] sm:$0xff] 0.0
          %320 = vst [vmem:[#allocation2 + $0x20] sm:$0xff] 0.0
          %321 = vst [vmem:[#allocation2 + $0x28] sm:$0xff] 0.0
          %322 = vst [vmem:[#allocation2 + $0x30] sm:$0xff] 0.0
          %323 = vst [vmem:[#allocation2 + $0x38] sm:$0xff] 0.0
          %324 = vst [vmem:[#allocation2 + $0x40] sm:$0xff] 0.0
          %325 = vst [vmem:[#allocation2 + $0x48] sm:$0xff] 0.0
          %326 = vst [vmem:[#allocation2 + $0x50] sm:$0xff] 0.0
          %327 = vst [vmem:[#allocation2 + $0x58] sm:$0xff] 0.0
          %328 = vst [vmem:[#allocation2 + $0x60] sm:$0xff] 0.0
          %329 = vst [vmem:[#allocation2 + $0x68] sm:$0xff] 0.0
          %330 = vst [vmem:[#allocation2 + $0x70] sm:$0xff] 0.0
          %331 = vst [vmem:[#allocation2 + $0x78] sm:$0xff] 0.0
          %332 = vst [vmem:[#allocation2 + $0x80] sm:$0xff] 0.0
          %333 = vst [vmem:[#allocation2 + $0x88] sm:$0xff] 0.0
          %334 = vst [vmem:[#allocation2 + $0x90] sm:$0xff] 0.0
          %335 = vst [vmem:[#allocation2 + $0x98] sm:$0xff] 0.0
          %336 = vst [vmem:[#allocation2 + $0xa0] sm:$0xff] 0.0
          %337 = vst [vmem:[#allocation2 + $0xa8] sm:$0xff] 0.0
          %338 = vst [vmem:[#allocation2 + $0xb0] sm:$0xff] 0.0
          %339 = vst [vmem:[#allocation2 + $0xb8] sm:$0xff] 0.0
          %340 = vst [vmem:[#allocation2 + $0xc0] sm:$0xff] 0.0
          %341 = vst [vmem:[#allocation2 + $0xc8] sm:$0xff] 0.0
          %342 = vst [vmem:[#allocation2 + $0xd0] sm:$0xff] 0.0
          %343 = vst [vmem:[#allocation2 + $0xd8] sm:$0xff] 0.0
          %344 = vst [vmem:[#allocation2 + $0xe0] sm:$0xff] 0.0
          %345 = vst [vmem:[#allocation2 + $0xe8] sm:$0xff] 0.0
          %346 = vst [vmem:[#allocation2 + $0xf0] sm:$0xff] 0.0
          %347 = vst [vmem:[#allocation2 + $0xf8] sm:$0xff] 0.0
        $region56: #{tpu_custom_call.1} parent=35 // pred_fallthru
          _
        %v348 = vld [vmem:[#allocation2] sm:$0xff]
        %v349 = vld [vmem:[#allocation2 + $0x8] sm:$0xff]
        %v350 = vld [vmem:[#allocation2 + $0x10] sm:$0xff]
        %v351 = vld [vmem:[#allocation2 + $0x18] sm:$0xff]
        %v352 = vld [vmem:[#allocation2 + $0x20] sm:$0xff]
        %v353 = vld [vmem:[#allocation2 + $0x28] sm:$0xff]
        %v354 = vld [vmem:[#allocation2 + $0x30] sm:$0xff]
        %v355 = vld [vmem:[#allocation2 + $0x38] sm:$0xff]
        %v356 = vld [vmem:[#allocation2 + $0x40] sm:$0xff]
        %v357 = vld [vmem:[#allocation2 + $0x48] sm:$0xff]
        %v358 = vld [vmem:[#allocation2 + $0x50] sm:$0xff]
        %v359 = vld [vmem:[#allocation2 + $0x58] sm:$0xff]
        %v360 = vld [vmem:[#allocation2 + $0x60] sm:$0xff]
        %v361 = vld [vmem:[#allocation2 + $0x68] sm:$0xff]
        %v362 = vld [vmem:[#allocation2 + $0x70] sm:$0xff]
        %v363 = vld [vmem:[#allocation2 + $0x78] sm:$0xff]
        %v364 = vld [vmem:[#allocation2 + $0x80] sm:$0xff]
        %v365 = vld [vmem:[#allocation2 + $0x88] sm:$0xff]
        %v366 = vld [vmem:[#allocation2 + $0x90] sm:$0xff]
        %v367 = vld [vmem:[#allocation2 + $0x98] sm:$0xff]
        %v368 = vld [vmem:[#allocation2 + $0xa0] sm:$0xff]
        %v369 = vld [vmem:[#allocation2 + $0xa8] sm:$0xff]
        %v370 = vld [vmem:[#allocation2 + $0xb0] sm:$0xff]
        %v371 = vld [vmem:[#allocation2 + $0xb8] sm:$0xff]
        %v372 = vld [vmem:[#allocation2 + $0xc0] sm:$0xff]
        %v373 = vld [vmem:[#allocation2 + $0xc8] sm:$0xff]
        %v374 = vld [vmem:[#allocation2 + $0xd0] sm:$0xff]
        %v375 = vld [vmem:[#allocation2 + $0xd8] sm:$0xff]
        %v376 = vld [vmem:[#allocation2 + $0xe0] sm:$0xff]
        %v377 = vld [vmem:[#allocation2 + $0xe8] sm:$0xff]
        %v378 = vld [vmem:[#allocation2 + $0xf0] sm:$0xff]
        %v379 = vld [vmem:[#allocation2 + $0xf8] sm:$0xff]
        %v380 = vld [vmem:[%s260] sm:$0xff]
        %v381 = vld [vmem:[%s260 + $0x8] sm:$0xff]
        %v382 = vld [vmem:[%s260 + $0x10] sm:$0xff]
        %v383 = vld [vmem:[%s260 + $0x18] sm:$0xff]
        %v384 = vld [vmem:[%s260 + $0x20] sm:$0xff]
        %v385 = vld [vmem:[%s260 + $0x28] sm:$0xff]
        %v386 = vld [vmem:[%s260 + $0x30] sm:$0xff]
        %v387 = vld [vmem:[%s260 + $0x38] sm:$0xff]
        %v388 = vld [vmem:[%s260 + $0x40] sm:$0xff]
        %v389 = vld [vmem:[%s260 + $0x48] sm:$0xff]
        %v390 = vld [vmem:[%s260 + $0x50] sm:$0xff]
        %v391 = vld [vmem:[%s260 + $0x58] sm:$0xff]
        %v392 = vld [vmem:[%s260 + $0x60] sm:$0xff]
        %v393 = vld [vmem:[%s260 + $0x68] sm:$0xff]
        %v394 = vld [vmem:[%s260 + $0x70] sm:$0xff]
        %v395 = vld [vmem:[%s260 + $0x78] sm:$0xff]
        %v396 = vld [vmem:[%s260 + $0x80] sm:$0xff]
        %v397 = vld [vmem:[%s260 + $0x88] sm:$0xff]
        %v398 = vld [vmem:[%s260 + $0x90] sm:$0xff]
        %v399 = vld [vmem:[%s260 + $0x98] sm:$0xff]
        %v400 = vld [vmem:[%s260 + $0xa0] sm:$0xff]
        %v401 = vld [vmem:[%s260 + $0xa8] sm:$0xff]
        %v402 = vld [vmem:[%s260 + $0xb0] sm:$0xff]
        %v403 = vld [vmem:[%s260 + $0xb8] sm:$0xff]
        %v404 = vld [vmem:[%s260 + $0xc0] sm:$0xff]
        %v405 = vld [vmem:[%s260 + $0xc8] sm:$0xff]
        %v406 = vld [vmem:[%s260 + $0xd0] sm:$0xff]
        %v407 = vld [vmem:[%s260 + $0xd8] sm:$0xff]
        %v408 = vld [vmem:[%s260 + $0xe0] sm:$0xff]
        %v409 = vld [vmem:[%s260 + $0xe8] sm:$0xff]
        %v410 = vld [vmem:[%s260 + $0xf0] sm:$0xff]
        %v411 = vld [vmem:[%s260 + $0xf8] sm:$0xff]
        %v412 = vld [vmem:[%s260 + $0x100] sm:$0xff]
        %v413 = vld [vmem:[%s260 + $0x108] sm:$0xff]
        %v414 = vld [vmem:[%s260 + $0x110] sm:$0xff]
        %v415 = vld [vmem:[%s260 + $0x118] sm:$0xff]
        %v416 = vld [vmem:[%s260 + $0x120] sm:$0xff]
        %v417 = vld [vmem:[%s260 + $0x128] sm:$0xff]
        %v418 = vld [vmem:[%s260 + $0x130] sm:$0xff]
        %v419 = vld [vmem:[%s260 + $0x138] sm:$0xff]
        %v420 = vld [vmem:[%s260 + $0x140] sm:$0xff]
        %v421 = vld [vmem:[%s260 + $0x148] sm:$0xff]
        %v422 = vld [vmem:[%s260 + $0x150] sm:$0xff]
        %v423 = vld [vmem:[%s260 + $0x158] sm:$0xff]
        %v424 = vld [vmem:[%s260 + $0x160] sm:$0xff]
        %v425 = vld [vmem:[%s260 + $0x168] sm:$0xff]
        %v426 = vld [vmem:[%s260 + $0x170] sm:$0xff]
        %v427 = vld [vmem:[%s260 + $0x178] sm:$0xff]
        %v428 = vld [vmem:[%s260 + $0x180] sm:$0xff]
        %v429 = vld [vmem:[%s260 + $0x188] sm:$0xff]
        %v430 = vld [vmem:[%s260 + $0x190] sm:$0xff]
        %v431 = vld [vmem:[%s260 + $0x198] sm:$0xff]
        %v432 = vld [vmem:[%s260 + $0x1a0] sm:$0xff]
        %v433 = vld [vmem:[%s260 + $0x1a8] sm:$0xff]
        %v434 = vld [vmem:[%s260 + $0x1b0] sm:$0xff]
        %v435 = vld [vmem:[%s260 + $0x1b8] sm:$0xff]
        %v436 = vld [vmem:[%s260 + $0x1c0] sm:$0xff]
        %v437 = vld [vmem:[%s260 + $0x1c8] sm:$0xff]
        %v438 = vld [vmem:[%s260 + $0x1d0] sm:$0xff]
        %v439 = vld [vmem:[%s260 + $0x1d8] sm:$0xff]
        %v440 = vld [vmem:[%s260 + $0x1e0] sm:$0xff]
        %v441 = vld [vmem:[%s260 + $0x1e8] sm:$0xff]
        %v442 = vld [vmem:[%s260 + $0x1f0] sm:$0xff]
        %v443 = vld [vmem:[%s260 + $0x1f8] sm:$0xff]
        %v444 = vld [vmem:[%s260 + $0x200] sm:$0xff]
        %v445 = vld [vmem:[%s260 + $0x208] sm:$0xff]
        %v446 = vld [vmem:[%s260 + $0x210] sm:$0xff]
        %v447 = vld [vmem:[%s260 + $0x218] sm:$0xff]
        %v448 = vld [vmem:[%s260 + $0x220] sm:$0xff]
        %v449 = vld [vmem:[%s260 + $0x228] sm:$0xff]
        %v450 = vld [vmem:[%s260 + $0x230] sm:$0xff]
        %v451 = vld [vmem:[%s260 + $0x238] sm:$0xff]
        %v452 = vld [vmem:[%s260 + $0x240] sm:$0xff]
        %v453 = vld [vmem:[%s260 + $0x248] sm:$0xff]
        %v454 = vld [vmem:[%s260 + $0x250] sm:$0xff]
        %v455 = vld [vmem:[%s260 + $0x258] sm:$0xff]
        %v456 = vld [vmem:[%s260 + $0x260] sm:$0xff]
        %v457 = vld [vmem:[%s260 + $0x268] sm:$0xff]
        %v458 = vld [vmem:[%s260 + $0x270] sm:$0xff]
        %v459 = vld [vmem:[%s260 + $0x278] sm:$0xff]
        %v460 = vld [vmem:[%s260 + $0x280] sm:$0xff]
        %v461 = vld [vmem:[%s260 + $0x288] sm:$0xff]
        %v462 = vld [vmem:[%s260 + $0x290] sm:$0xff]
        %v463 = vld [vmem:[%s260 + $0x298] sm:$0xff]
        %v464 = vld [vmem:[%s260 + $0x2a0] sm:$0xff]
        %v465 = vld [vmem:[%s260 + $0x2a8] sm:$0xff]
        %v466 = vld [vmem:[%s260 + $0x2b0] sm:$0xff]
        %v467 = vld [vmem:[%s260 + $0x2b8] sm:$0xff]
        %v468 = vld [vmem:[%s260 + $0x2c0] sm:$0xff]
        %v469 = vld [vmem:[%s260 + $0x2c8] sm:$0xff]
        %v470 = vld [vmem:[%s260 + $0x2d0] sm:$0xff]
        %v471 = vld [vmem:[%s260 + $0x2d8] sm:$0xff]
        %v472 = vld [vmem:[%s260 + $0x2e0] sm:$0xff]
        %v473 = vld [vmem:[%s260 + $0x2e8] sm:$0xff]
        %v474 = vld [vmem:[%s260 + $0x2f0] sm:$0xff]
        %v475 = vld [vmem:[%s260 + $0x2f8] sm:$0xff]
        %v476 = vld [vmem:[%s260 + $0x300] sm:$0xff]
        %v477 = vld [vmem:[%s260 + $0x308] sm:$0xff]
        %v478 = vld [vmem:[%s260 + $0x310] sm:$0xff]
        %v479 = vld [vmem:[%s260 + $0x318] sm:$0xff]
        %v480 = vld [vmem:[%s260 + $0x320] sm:$0xff]
        %v481 = vld [vmem:[%s260 + $0x328] sm:$0xff]
        %v482 = vld [vmem:[%s260 + $0x330] sm:$0xff]
        %v483 = vld [vmem:[%s260 + $0x338] sm:$0xff]
        %v484 = vld [vmem:[%s260 + $0x340] sm:$0xff]
        %v485 = vld [vmem:[%s260 + $0x348] sm:$0xff]
        %v486 = vld [vmem:[%s260 + $0x350] sm:$0xff]
        %v487 = vld [vmem:[%s260 + $0x358] sm:$0xff]
        %v488 = vld [vmem:[%s260 + $0x360] sm:$0xff]
        %v489 = vld [vmem:[%s260 + $0x368] sm:$0xff]
        %v490 = vld [vmem:[%s260 + $0x370] sm:$0xff]
        %v491 = vld [vmem:[%s260 + $0x378] sm:$0xff]
        %v492 = vld [vmem:[%s260 + $0x380] sm:$0xff]
        %v493 = vld [vmem:[%s260 + $0x388] sm:$0xff]
        %v494 = vld [vmem:[%s260 + $0x390] sm:$0xff]
        %v495 = vld [vmem:[%s260 + $0x398] sm:$0xff]
        %v496 = vld [vmem:[%s260 + $0x3a0] sm:$0xff]
        %v497 = vld [vmem:[%s260 + $0x3a8] sm:$0xff]
        %v498 = vld [vmem:[%s260 + $0x3b0] sm:$0xff]
        %v499 = vld [vmem:[%s260 + $0x3b8] sm:$0xff]
        %v500 = vld [vmem:[%s260 + $0x3c0] sm:$0xff]
        %v501 = vld [vmem:[%s260 + $0x3c8] sm:$0xff]
        %v502 = vld [vmem:[%s260 + $0x3d0] sm:$0xff]
        %v503 = vld [vmem:[%s260 + $0x3d8] sm:$0xff]
        %v504 = vld [vmem:[%s260 + $0x3e0] sm:$0xff]
        %v505 = vld [vmem:[%s260 + $0x3e8] sm:$0xff]
        %v506 = vld [vmem:[%s260 + $0x3f0] sm:$0xff]
        %v507 = vld [vmem:[%s260 + $0x3f8] sm:$0xff]
        %v508 = vld [vmem:[#allocation6] sm:$0xff]
        %v509 = vld [vmem:[#allocation6 + $0x8] sm:$0xff]
        %v510 = vld [vmem:[#allocation6 + $0x10] sm:$0xff]
        %v511 = vld [vmem:[#allocation6 + $0x18] sm:$0xff]
        %v512 = vld [vmem:[#allocation6 + $0x20] sm:$0xff]
        %v513 = vld [vmem:[#allocation6 + $0x28] sm:$0xff]
        %v514 = vld [vmem:[#allocation6 + $0x30] sm:$0xff]
        %v515 = vld [vmem:[#allocation6 + $0x38] sm:$0xff]
        %v516 = vld [vmem:[#allocation6 + $0x40] sm:$0xff]
        %v517 = vld [vmem:[#allocation6 + $0x48] sm:$0xff]
        %v518 = vld [vmem:[#allocation6 + $0x50] sm:$0xff]
        %v519 = vld [vmem:[#allocation6 + $0x58] sm:$0xff]
        %v520 = vld [vmem:[#allocation6 + $0x60] sm:$0xff]
        %v521 = vld [vmem:[#allocation6 + $0x68] sm:$0xff]
        %v522 = vld [vmem:[#allocation6 + $0x70] sm:$0xff]
        %v523 = vld [vmem:[#allocation6 + $0x78] sm:$0xff]
        %v524 = vld [vmem:[#allocation6 + $0x80] sm:$0xff]
        %v525 = vld [vmem:[#allocation6 + $0x88] sm:$0xff]
        %v526 = vld [vmem:[#allocation6 + $0x90] sm:$0xff]
        %v527 = vld [vmem:[#allocation6 + $0x98] sm:$0xff]
        %v528 = vld [vmem:[#allocation6 + $0xa0] sm:$0xff]
        %v529 = vld [vmem:[#allocation6 + $0xa8] sm:$0xff]
        %v530 = vld [vmem:[#allocation6 + $0xb0] sm:$0xff]
        %v531 = vld [vmem:[#allocation6 + $0xb8] sm:$0xff]
        %v532 = vld [vmem:[#allocation6 + $0xc0] sm:$0xff]
        %v533 = vld [vmem:[#allocation6 + $0xc8] sm:$0xff]
        %v534 = vld [vmem:[#allocation6 + $0xd0] sm:$0xff]
        %v535 = vld [vmem:[#allocation6 + $0xd8] sm:$0xff]
        %v536 = vld [vmem:[#allocation6 + $0xe0] sm:$0xff]
        %v537 = vld [vmem:[#allocation6 + $0xe8] sm:$0xff]
        %v538 = vld [vmem:[#allocation6 + $0xf0] sm:$0xff]
        %v539 = vld [vmem:[#allocation6 + $0xf8] sm:$0xff]
        %v540 = vld [vmem:[#allocation6 + $0x100] sm:$0xff]
        %v541 = vld [vmem:[#allocation6 + $0x108] sm:$0xff]
        %v542 = vld [vmem:[#allocation6 + $0x110] sm:$0xff]
        %v543 = vld [vmem:[#allocation6 + $0x118] sm:$0xff]
        %v544 = vld [vmem:[#allocation6 + $0x120] sm:$0xff]
        %v545 = vld [vmem:[#allocation6 + $0x128] sm:$0xff]
        %v546 = vld [vmem:[#allocation6 + $0x130] sm:$0xff]
        %v547 = vld [vmem:[#allocation6 + $0x138] sm:$0xff]
        %v548 = vld [vmem:[#allocation6 + $0x140] sm:$0xff]
        %v549 = vld [vmem:[#allocation6 + $0x148] sm:$0xff]
        %v550 = vld [vmem:[#allocation6 + $0x150] sm:$0xff]
        %v551 = vld [vmem:[#allocation6 + $0x158] sm:$0xff]
        %v552 = vld [vmem:[#allocation6 + $0x160] sm:$0xff]
        %v553 = vld [vmem:[#allocation6 + $0x168] sm:$0xff]
        %v554 = vld [vmem:[#allocation6 + $0x170] sm:$0xff]
        %v555 = vld [vmem:[#allocation6 + $0x178] sm:$0xff]
        %v556 = vld [vmem:[#allocation6 + $0x180] sm:$0xff]
        %v557 = vld [vmem:[#allocation6 + $0x188] sm:$0xff]
        %v558 = vld [vmem:[#allocation6 + $0x190] sm:$0xff]
        %v559 = vld [vmem:[#allocation6 + $0x198] sm:$0xff]
        %v560 = vld [vmem:[#allocation6 + $0x1a0] sm:$0xff]
        %v561 = vld [vmem:[#allocation6 + $0x1a8] sm:$0xff]
        %v562 = vld [vmem:[#allocation6 + $0x1b0] sm:$0xff]
        %v563 = vld [vmem:[#allocation6 + $0x1b8] sm:$0xff]
        %v564 = vld [vmem:[#allocation6 + $0x1c0] sm:$0xff]
        %v565 = vld [vmem:[#allocation6 + $0x1c8] sm:$0xff]
        %v566 = vld [vmem:[#allocation6 + $0x1d0] sm:$0xff]
        %v567 = vld [vmem:[#allocation6 + $0x1d8] sm:$0xff]
        %v568 = vld [vmem:[#allocation6 + $0x1e0] sm:$0xff]
        %v569 = vld [vmem:[#allocation6 + $0x1e8] sm:$0xff]
        %v570 = vld [vmem:[#allocation6 + $0x1f0] sm:$0xff]
        %v571 = vld [vmem:[#allocation6 + $0x1f8] sm:$0xff]
        %572 = vmatprep.subr.mxu0 0.0
        %573 = vmatpush1.msra.mxu0 %v508
        %574 = vmatprep.subr.mxu0 0.0
        %575 = vmatpush1.msra.mxu0 %v509
        %576 = vmatprep.subr.mxu0 0.0
        %577 = vmatpush1.msra.mxu0 %v510
        %578 = vmatprep.subr.mxu0 0.0
        %579 = vmatpush1.msra.mxu0 %v511
        %580 = vmatprep.subr.mxu0 0.0
        %581 = vmatpush1.msra.mxu0 %v512
        %582 = vmatprep.subr.mxu0 0.0
        %583 = vmatpush1.msra.mxu0 %v513
        %584 = vmatprep.subr.mxu0 0.0
        %585 = vmatpush1.msra.mxu0 %v514
        %586 = vmatprep.subr.mxu0 0.0
        %587 = vmatpush1.msra.mxu0 %v515
        %588 = vmatprep.subr.mxu0 0.0
        %589 = vmatpush1.msra.mxu0 %v516
        %590 = vmatprep.subr.mxu0 0.0
        %591 = vmatpush1.msra.mxu0 %v517
        %592 = vmatprep.subr.mxu0 0.0
        %593 = vmatpush1.msra.mxu0 %v518
        %594 = vmatprep.subr.mxu0 0.0
        %595 = vmatpush1.msra.mxu0 %v519
        %596 = vmatprep.subr.mxu0 0.0
        %597 = vmatpush1.msra.mxu0 %v520
        %598 = vmatprep.subr.mxu0 0.0
        %599 = vmatpush1.msra.mxu0 %v521
        %600 = vmatprep.subr.mxu0 0.0
        %601 = vmatpush1.msra.mxu0 %v522
        %602 = vmatprep.subr.mxu0 0.0
        %603 = vmatpush1.msra.mxu0 %v523
        %604 = vmatprep.subr.mxu0 0.0
        %605 = vmatpush1.msra.mxu0 %v524
        %606 = vmatprep.subr.mxu0 0.0
        %607 = vmatpush1.msra.mxu0 %v525
        %608 = vmatprep.subr.mxu0 0.0
        %609 = vmatpush1.msra.mxu0 %v526
        %610 = vmatprep.subr.mxu0 0.0
        %611 = vmatpush1.msra.mxu0 %v527
        %612 = vmatprep.subr.mxu0 0.0
        %613 = vmatpush1.msra.mxu0 %v528
        %614 = vmatprep.subr.mxu0 0.0
        %615 = vmatpush1.msra.mxu0 %v529
        %616 = vmatprep.subr.mxu0 0.0
        %617 = vmatpush1.msra.mxu0 %v530
        %618 = vmatprep.subr.mxu0 0.0
        %619 = vmatpush1.msra.mxu0 %v531
        %620 = vmatprep.subr.mxu0 0.0
        %621 = vmatpush1.msra.mxu0 %v532
        %622 = vmatprep.subr.mxu0 0.0
        %623 = vmatpush1.msra.mxu0 %v533
        %624 = vmatprep.subr.mxu0 0.0
        %625 = vmatpush1.msra.mxu0 %v534
        %626 = vmatprep.subr.mxu0 0.0
        %627 = vmatpush1.msra.mxu0 %v535
        %628 = vmatprep.subr.mxu0 0.0
        %629 = vmatpush1.msra.mxu0 %v536
        %630 = vmatprep.subr.mxu0 0.0
        %631 = vmatpush1.msra.mxu0 %v537
        %632 = vmatprep.subr.mxu0 0.0
        %633 = vmatpush1.msra.mxu0 %v538
        %634 = vmatprep.subr.mxu0 0.0
        %635 = vmatpush1.msra.mxu0 %v539
        %636 = vmatprep.mubr.f32.mxu0 %v381
        %637 = vmatmul.mubr.f32.gmra.mrb[0].mxu0 %v380
        %v638 = vpop.f32.mrb[0].mxu0
        %v639 = vadd.f32 0.0, %v638
        %v640 = vpop.f32.mrb[0].mxu0
        %641 = vmatprep.mubr.f32.mxu0 %v385
        %642 = vmatmul.mubr.f32.gmra.mrb[0].mxu0 %v384
        %v643 = vpop.f32.mrb[0].mxu0
        %v644 = vadd.f32 0.0, %v643
        %v645 = vpop.f32.mrb[0].mxu0
        %646 = vmatprep.mubr.f32.mxu0 %v389
        %647 = vmatmul.mubr.f32.gmra.mrb[0].mxu0 %v388
        %v648 = vpop.f32.mrb[0].mxu0
        %v649 = vadd.f32 0.0, %v648
        %v650 = vpop.f32.mrb[0].mxu0
        %651 = vmatprep.mubr.f32.mxu0 %v393
        %652 = vmatmul.mubr.f32.gmra.mrb[0].mxu0 %v392
        %v653 = vpop.f32.mrb[0].mxu0
        %v654 = vadd.f32 0.0, %v653
        %v655 = vpop.f32.mrb[0].mxu0
        %656 = vmatprep.mubr.f32.mxu0 %v397
        %657 = vmatmul.mubr.f32.gmra.mrb[0].mxu0 %v396
        %v658 = vpop.f32.mrb[0].mxu0
        %v659 = vadd.f32 0.0, %v658
        %v660 = vpop.f32.mrb[0].mxu0
        %661 = vmatprep.mubr.f32.mxu0 %v401
        %662 = vmatmul.mubr.f32.gmra.mrb[0].mxu0 %v400
        %v663 = vpop.f32.mrb[0].mxu0
        %v664 = vadd.f32 0.0, %v663
        %v665 = vpop.f32.mrb[0].mxu0
        %666 = vmatprep.mubr.f32.mxu0 %v405
        %667 = vmatmul.mubr.f32.gmra.mrb[0].mxu0 %v404
        %v668 = vpop.f32.mrb[0].mxu0
        %v669 = vadd.f32 0.0, %v668
        %v670 = vpop.f32.mrb[0].mxu0
        %671 = vmatprep.mubr.f32.mxu0 %v409
        %672 = vmatmul.mubr.f32.gmra.mrb[0].mxu0 %v408
        %v673 = vpop.f32.mrb[0].mxu0
        %v674 = vadd.f32 0.0, %v673
        %v675 = vpop.f32.mrb[0].mxu0
        %676 = vmatprep.mubr.f32.mxu0 %v413
        %677 = vmatmul.mubr.f32.gmra.mrb[0].mxu0 %v412
        %v678 = vpop.f32.mrb[0].mxu0
        %v679 = vadd.f32 0.0, %v678
        %v680 = vpop.f32.mrb[0].mxu0
        %681 = vmatprep.mubr.f32.mxu0 %v417
        %682 = vmatmul.mubr.f32.gmra.mrb[0].mxu0 %v416
        %v683 = vpop.f32.mrb[0].mxu0
        %v684 = vadd.f32 0.0, %v683
        %v685 = vpop.f32.mrb[0].mxu0
        %686 = vmatprep.mubr.f32.mxu0 %v421
        %687 = vmatmul.mubr.f32.gmra.mrb[0].mxu0 %v420
        %v688 = vpop.f32.mrb[0].mxu0
        %v689 = vadd.f32 0.0, %v688
        %v690 = vpop.f32.mrb[0].mxu0
        %691 = vmatprep.mubr.f32.mxu0 %v425
        %692 = vmatmul.mubr.f32.gmra.mrb[0].mxu0 %v424
        %v693 = vpop.f32.mrb[0].mxu0
        %v694 = vadd.f32 0.0, %v693
        %v695 = vpop.f32.mrb[0].mxu0
        %696 = vmatprep.mubr.f32.mxu0 %v429
        %697 = vmatmul.mubr.f32.gmra.mrb[0].mxu0 %v428
        %v698 = vpop.f32.mrb[0].mxu0
        %v699 = vadd.f32 0.0, %v698
        %v700 = vpop.f32.mrb[0].mxu0
        %701 = vmatprep.mubr.f32.mxu0 %v433
        %702 = vmatmul.mubr.f32.gmra.mrb[0].mxu0 %v432
        %v703 = vpop.f32.mrb[0].mxu0
        %v704 = vadd.f32 0.0, %v703
        %v705 = vpop.f32.mrb[0].mxu0
        %706 = vmatprep.mubr.f32.mxu0 %v437
        %707 = vmatmul.mubr.f32.gmra.mrb[0].mxu0 %v436
        %v708 = vpop.f32.mrb[0].mxu0
        %v709 = vadd.f32 0.0, %v708
        %v710 = vpop.f32.mrb[0].mxu0
        %711 = vmatprep.mubr.f32.mxu0 %v441
        %712 = vmatmul.mubr.f32.gmra.mrb[0].mxu0 %v440
        %v713 = vpop.f32.mrb[0].mxu0
        %v714 = vadd.f32 0.0, %v713
        %v715 = vpop.f32.mrb[0].mxu0
        %716 = vmatprep.mubr.f32.mxu0 %v445
        %717 = vmatmul.mubr.f32.gmra.mrb[0].mxu0 %v444
        %v718 = vpop.f32.mrb[0].mxu0
        %v719 = vadd.f32 0.0, %v718
        %v720 = vpop.f32.mrb[0].mxu0
        %721 = vmatprep.mubr.f32.mxu0 %v449
        %722 = vmatmul.mubr.f32.gmra.mrb[0].mxu0 %v448
        %v723 = vpop.f32.mrb[0].mxu0
        %v724 = vadd.f32 0.0, %v723
        %v725 = vpop.f32.mrb[0].mxu0
        %726 = vmatprep.mubr.f32.mxu0 %v453
        %727 = vmatmul.mubr.f32.gmra.mrb[0].mxu0 %v452
        %v728 = vpop.f32.mrb[0].mxu0
        %v729 = vadd.f32 0.0, %v728
        %v730 = vpop.f32.mrb[0].mxu0
        %731 = vmatprep.mubr.f32.mxu0 %v457
        %732 = vmatmul.mubr.f32.gmra.mrb[0].mxu0 %v456
        %v733 = vpop.f32.mrb[0].mxu0
        %v734 = vadd.f32 0.0, %v733
        %v735 = vpop.f32.mrb[0].mxu0
        %736 = vmatprep.mubr.f32.mxu0 %v461
        %737 = vmatmul.mubr.f32.gmra.mrb[0].mxu0 %v460
        %v738 = vpop.f32.mrb[0].mxu0
        %v739 = vadd.f32 0.0, %v738
        %v740 = vpop.f32.mrb[0].mxu0
        %741 = vmatprep.mubr.f32.mxu0 %v465
        %742 = vmatmul.mubr.f32.gmra.mrb[0].mxu0 %v464
        %v743 = vpop.f32.mrb[0].mxu0
        %v744 = vadd.f32 0.0, %v743
        %v745 = vpop.f32.mrb[0].mxu0
        %746 = vmatprep.mubr.f32.mxu0 %v469
        %747 = vmatmul.mubr.f32.gmra.mrb[0].mxu0 %v468
        %v748 = vpop.f32.mrb[0].mxu0
        %v749 = vadd.f32 0.0, %v748
        %v750 = vpop.f32.mrb[0].mxu0
        %751 = vmatprep.mubr.f32.mxu0 %v473
        %752 = vmatmul.mubr.f32.gmra.mrb[0].mxu0 %v472
        %v753 = vpop.f32.mrb[0].mxu0
        %v754 = vadd.f32 0.0, %v753
        %v755 = vpop.f32.mrb[0].mxu0
        %756 = vmatprep.mubr.f32.mxu0 %v477
        %757 = vmatmul.mubr.f32.gmra.mrb[0].mxu0 %v476
        %v758 = vpop.f32.mrb[0].mxu0
        %v759 = vadd.f32 0.0, %v758
        %v760 = vpop.f32.mrb[0].mxu0
        %761 = vmatprep.mubr.f32.mxu0 %v481
        %762 = vmatmul.mubr.f32.gmra.mrb[0].mxu0 %v480
        %v763 = vpop.f32.mrb[0].mxu0
        %v764 = vadd.f32 0.0, %v763
        %v765 = vpop.f32.mrb[0].mxu0
        %766 = vmatprep.mubr.f32.mxu0 %v485
        %767 = vmatmul.mubr.f32.gmra.mrb[0].mxu0 %v484
        %v768 = vpop.f32.mrb[0].mxu0
        %v769 = vadd.f32 0.0, %v768
        %v770 = vpop.f32.mrb[0].mxu0
        %771 = vmatprep.mubr.f32.mxu0 %v489
        %772 = vmatmul.mubr.f32.gmra.mrb[0].mxu0 %v488
        %v773 = vpop.f32.mrb[0].mxu0
        %v774 = vadd.f32 0.0, %v773
        %v775 = vpop.f32.mrb[0].mxu0
        %776 = vmatprep.mubr.f32.mxu0 %v493
        %777 = vmatmul.mubr.f32.gmra.mrb[0].mxu0 %v492
        %v778 = vpop.f32.mrb[0].mxu0
        %v779 = vadd.f32 0.0, %v778
        %v780 = vpop.f32.mrb[0].mxu0
        %781 = vmatprep.mubr.f32.mxu0 %v497
        %782 = vmatmul.mubr.f32.gmra.mrb[0].mxu0 %v496
        %v783 = vpop.f32.mrb[0].mxu0
        %v784 = vadd.f32 0.0, %v783
        %v785 = vpop.f32.mrb[0].mxu0
        %786 = vmatprep.mubr.f32.mxu0 %v501
        %787 = vmatmul.mubr.f32.gmra.mrb[0].mxu0 %v500
        %v788 = vpop.f32.mrb[0].mxu0
        %v789 = vadd.f32 0.0, %v788
        %v790 = vpop.f32.mrb[0].mxu0
        %791 = vmatprep.mubr.f32.mxu0 %v505
        %792 = vmatmul.mubr.f32.gmra.mrb[0].mxu0 %v504
        %v793 = vpop.f32.mrb[0].mxu0
        %v794 = vadd.f32 0.0, %v793
        %v795 = vpop.f32.mrb[0].mxu0
        %796 = vdwg.mxu0
        %797 = vmatprep.subr.mxu0 0.0
        %798 = vmatpush1.msra.mxu0 %v540
        %799 = vmatprep.subr.mxu0 0.0
        %800 = vmatpush1.msra.mxu0 %v541
        %801 = vmatprep.subr.mxu0 0.0
        %802 = vmatpush1.msra.mxu0 %v542
        %803 = vmatprep.subr.mxu0 0.0
        %804 = vmatpush1.msra.mxu0 %v543
        %805 = vmatprep.subr.mxu0 0.0
        %806 = vmatpush1.msra.mxu0 %v544
        %807 = vmatprep.subr.mxu0 0.0
        %808 = vmatpush1.msra.mxu0 %v545
        %809 = vmatprep.subr.mxu0 0.0
        %810 = vmatpush1.msra.mxu0 %v546
        %811 = vmatprep.subr.mxu0 0.0
        %812 = vmatpush1.msra.mxu0 %v547
        %813 = vmatprep.subr.mxu0 0.0
        %814 = vmatpush1.msra.mxu0 %v548
        %815 = vmatprep.subr.mxu0 0.0
        %816 = vmatpush1.msra.mxu0 %v549
        %817 = vmatprep.subr.mxu0 0.0
        %818 = vmatpush1.msra.mxu0 %v550
        %819 = vmatprep.subr.mxu0 0.0
        %820 = vmatpush1.msra.mxu0 %v551
        %821 = vmatprep.subr.mxu0 0.0
        %822 = vmatpush1.msra.mxu0 %v552
        %823 = vmatprep.subr.mxu0 0.0
        %824 = vmatpush1.msra.mxu0 %v553
        %825 = vmatprep.subr.mxu0 0.0
        %826 = vmatpush1.msra.mxu0 %v554
        %827 = vmatprep.subr.mxu0 0.0
        %828 = vmatpush1.msra.mxu0 %v555
        %829 = vmatprep.subr.mxu0 0.0
        %830 = vmatpush1.msra.mxu0 %v556
        %831 = vmatprep.subr.mxu0 0.0
        %832 = vmatpush1.msra.mxu0 %v557
        %833 = vmatprep.subr.mxu0 0.0
        %834 = vmatpush1.msra.mxu0 %v558
        %835 = vmatprep.subr.mxu0 0.0
        %836 = vmatpush1.msra.mxu0 %v559
        %837 = vmatprep.subr.mxu0 0.0
        %838 = vmatpush1.msra.mxu0 %v560
        %839 = vmatprep.subr.mxu0 0.0
        %840 = vmatpush1.msra.mxu0 %v561
        %841 = vmatprep.subr.mxu0 0.0
        %842 = vmatpush1.msra.mxu0 %v562
        %843 = vmatprep.subr.mxu0 0.0
        %844 = vmatpush1.msra.mxu0 %v563
        %845 = vmatprep.subr.mxu0 0.0
        %846 = vmatpush1.msra.mxu0 %v564
        %847 = vmatprep.subr.mxu0 0.0
        %848 = vmatpush1.msra.mxu0 %v565
        %849 = vmatprep.subr.mxu0 0.0
        %850 = vmatpush1.msra.mxu0 %v566
        %851 = vmatprep.subr.mxu0 0.0
        %852 = vmatpush1.msra.mxu0 %v567
        %853 = vmatprep.subr.mxu0 0.0
        %854 = vmatpush1.msra.mxu0 %v568
        %855 = vmatprep.subr.mxu0 0.0
        %856 = vmatpush1.msra.mxu0 %v569
        %857 = vmatprep.subr.mxu0 0.0
        %858 = vmatpush1.msra.mxu0 %v570
        %859 = vmatprep.subr.mxu0 0.0
        %860 = vmatpush1.msra.mxu0 %v571
        %861 = vmatprep.mubr.f32.mxu0 %v383
        %862 = vmatmul.mubr.f32.gmra.mrb[0].mxu0 %v382
        %v863 = vpop.f32.mrb[0].mxu0
        %v864 = vadd.f32 %v639, %v863
        %v865 = vpop.f32.mrb[0].mxu0
        %866 = vmatprep.mubr.f32.mxu0 %v387
        %867 = vmatmul.mubr.f32.gmra.mrb[0].mxu0 %v386
        %v868 = vpop.f32.mrb[0].mxu0
        %v869 = vadd.f32 %v644, %v868
        %v870 = vpop.f32.mrb[0].mxu0
        %871 = vmatprep.mubr.f32.mxu0 %v391
        %872 = vmatmul.mubr.f32.gmra.mrb[0].mxu0 %v390
        %v873 = vpop.f32.mrb[0].mxu0
        %v874 = vadd.f32 %v649, %v873
        %v875 = vpop.f32.mrb[0].mxu0
        %876 = vmatprep.mubr.f32.mxu0 %v395
        %877 = vmatmul.mubr.f32.gmra.mrb[0].mxu0 %v394
        %v878 = vpop.f32.mrb[0].mxu0
        %v879 = vadd.f32 %v654, %v878
        %v880 = vpop.f32.mrb[0].mxu0
        %881 = vmatprep.mubr.f32.mxu0 %v399
        %882 = vmatmul.mubr.f32.gmra.mrb[0].mxu0 %v398
        %v883 = vpop.f32.mrb[0].mxu0
        %v884 = vadd.f32 %v659, %v883
        %v885 = vpop.f32.mrb[0].mxu0
        %886 = vmatprep.mubr.f32.mxu0 %v403
        %887 = vmatmul.mubr.f32.gmra.mrb[0].mxu0 %v402
        %v888 = vpop.f32.mrb[0].mxu0
        %v889 = vadd.f32 %v664, %v888
        %v890 = vpop.f32.mrb[0].mxu0
        %891 = vmatprep.mubr.f32.mxu0 %v407
        %892 = vmatmul.mubr.f32.gmra.mrb[0].mxu0 %v406
        %v893 = vpop.f32.mrb[0].mxu0
        %v894 = vadd.f32 %v669, %v893
        %v895 = vpop.f32.mrb[0].mxu0
        %896 = vmatprep.mubr.f32.mxu0 %v411
        %897 = vmatmul.mubr.f32.gmra.mrb[0].mxu0 %v410
        %v898 = vpop.f32.mrb[0].mxu0
        %v899 = vadd.f32 %v674, %v898
        %v900 = vpop.f32.mrb[0].mxu0
        %901 = vmatprep.mubr.f32.mxu0 %v415
        %902 = vmatmul.mubr.f32.gmra.mrb[0].mxu0 %v414
        %v903 = vpop.f32.mrb[0].mxu0
        %v904 = vadd.f32 %v679, %v903
        %v905 = vpop.f32.mrb[0].mxu0
        %906 = vmatprep.mubr.f32.mxu0 %v419
        %907 = vmatmul.mubr.f32.gmra.mrb[0].mxu0 %v418
        %v908 = vpop.f32.mrb[0].mxu0
        %v909 = vadd.f32 %v684, %v908
        %v910 = vpop.f32.mrb[0].mxu0
        %911 = vmatprep.mubr.f32.mxu0 %v423
        %912 = vmatmul.mubr.f32.gmra.mrb[0].mxu0 %v422
        %v913 = vpop.f32.mrb[0].mxu0
        %v914 = vadd.f32 %v689, %v913
        %v915 = vpop.f32.mrb[0].mxu0
        %916 = vmatprep.mubr.f32.mxu0 %v427
        %917 = vmatmul.mubr.f32.gmra.mrb[0].mxu0 %v426
        %v918 = vpop.f32.mrb[0].mxu0
        %v919 = vadd.f32 %v694, %v918
        %v920 = vpop.f32.mrb[0].mxu0
        %921 = vmatprep.mubr.f32.mxu0 %v431
        %922 = vmatmul.mubr.f32.gmra.mrb[0].mxu0 %v430
        %v923 = vpop.f32.mrb[0].mxu0
        %v924 = vadd.f32 %v699, %v923
        %v925 = vpop.f32.mrb[0].mxu0
        %926 = vmatprep.mubr.f32.mxu0 %v435
        %927 = vmatmul.mubr.f32.gmra.mrb[0].mxu0 %v434
        %v928 = vpop.f32.mrb[0].mxu0
        %v929 = vadd.f32 %v704, %v928
        %v930 = vpop.f32.mrb[0].mxu0
        %931 = vmatprep.mubr.f32.mxu0 %v439
        %932 = vmatmul.mubr.f32.gmra.mrb[0].mxu0 %v438
        %v933 = vpop.f32.mrb[0].mxu0
        %v934 = vadd.f32 %v709, %v933
        %v935 = vpop.f32.mrb[0].mxu0
        %936 = vmatprep.mubr.f32.mxu0 %v443
        %937 = vmatmul.mubr.f32.gmra.mrb[0].mxu0 %v442
        %v938 = vpop.f32.mrb[0].mxu0
        %v939 = vadd.f32 %v714, %v938
        %v940 = vpop.f32.mrb[0].mxu0
        %941 = vmatprep.mubr.f32.mxu0 %v447
        %942 = vmatmul.mubr.f32.gmra.mrb[0].mxu0 %v446
        %v943 = vpop.f32.mrb[0].mxu0
        %v944 = vadd.f32 %v719, %v943
        %v945 = vpop.f32.mrb[0].mxu0
        %946 = vmatprep.mubr.f32.mxu0 %v451
        %947 = vmatmul.mubr.f32.gmra.mrb[0].mxu0 %v450
        %v948 = vpop.f32.mrb[0].mxu0
        %v949 = vadd.f32 %v724, %v948
        %v950 = vpop.f32.mrb[0].mxu0
        %951 = vmatprep.mubr.f32.mxu0 %v455
        %952 = vmatmul.mubr.f32.gmra.mrb[0].mxu0 %v454
        %v953 = vpop.f32.mrb[0].mxu0
        %v954 = vadd.f32 %v729, %v953
        %v955 = vpop.f32.mrb[0].mxu0
        %956 = vmatprep.mubr.f32.mxu0 %v459
        %957 = vmatmul.mubr.f32.gmra.mrb[0].mxu0 %v458
        %v958 = vpop.f32.mrb[0].mxu0
        %v959 = vadd.f32 %v734, %v958
        %v960 = vpop.f32.mrb[0].mxu0
        %961 = vmatprep.mubr.f32.mxu0 %v463
        %962 = vmatmul.mubr.f32.gmra.mrb[0].mxu0 %v462
        %v963 = vpop.f32.mrb[0].mxu0
        %v964 = vadd.f32 %v739, %v963
        %v965 = vpop.f32.mrb[0].mxu0
        %966 = vmatprep.mubr.f32.mxu0 %v467
        %967 = vmatmul.mubr.f32.gmra.mrb[0].mxu0 %v466
        %v968 = vpop.f32.mrb[0].mxu0
        %v969 = vadd.f32 %v744, %v968
        %v970 = vpop.f32.mrb[0].mxu0
        %971 = vmatprep.mubr.f32.mxu0 %v471
        %972 = vmatmul.mubr.f32.gmra.mrb[0].mxu0 %v470
        %v973 = vpop.f32.mrb[0].mxu0
        %v974 = vadd.f32 %v749, %v973
        %v975 = vpop.f32.mrb[0].mxu0
        %976 = vmatprep.mubr.f32.mxu0 %v475
        %977 = vmatmul.mubr.f32.gmra.mrb[0].mxu0 %v474
        %v978 = vpop.f32.mrb[0].mxu0
        %v979 = vadd.f32 %v754, %v978
        %v980 = vpop.f32.mrb[0].mxu0
        %981 = vmatprep.mubr.f32.mxu0 %v479
        %982 = vmatmul.mubr.f32.gmra.mrb[0].mxu0 %v478
        %v983 = vpop.f32.mrb[0].mxu0
        %v984 = vadd.f32 %v759, %v983
        %v985 = vpop.f32.mrb[0].mxu0
        %986 = vmatprep.mubr.f32.mxu0 %v483
        %987 = vmatmul.mubr.f32.gmra.mrb[0].mxu0 %v482
        %v988 = vpop.f32.mrb[0].mxu0
        %v989 = vadd.f32 %v764, %v988
        %v990 = vpop.f32.mrb[0].mxu0
        %991 = vmatprep.mubr.f32.mxu0 %v487
        %992 = vmatmul.mubr.f32.gmra.mrb[0].mxu0 %v486
        %v993 = vpop.f32.mrb[0].mxu0
        %v994 = vadd.f32 %v769, %v993
        %v995 = vpop.f32.mrb[0].mxu0
        %996 = vmatprep.mubr.f32.mxu0 %v491
        %997 = vmatmul.mubr.f32.gmra.mrb[0].mxu0 %v490
        %v998 = vpop.f32.mrb[0].mxu0
        %v999 = vadd.f32 %v774, %v998
        %v1000 = vpop.f32.mrb[0].mxu0
        %1001 = vmatprep.mubr.f32.mxu0 %v495
        %1002 = vmatmul.mubr.f32.gmra.mrb[0].mxu0 %v494
        %v1003 = vpop.f32.mrb[0].mxu0
        %v1004 = vadd.f32 %v779, %v1003
        %v1005 = vpop.f32.mrb[0].mxu0
        %1006 = vmatprep.mubr.f32.mxu0 %v499
        %1007 = vmatmul.mubr.f32.gmra.mrb[0].mxu0 %v498
        %v1008 = vpop.f32.mrb[0].mxu0
        %v1009 = vadd.f32 %v784, %v1008
        %v1010 = vpop.f32.mrb[0].mxu0
        %1011 = vmatprep.mubr.f32.mxu0 %v503
        %1012 = vmatmul.mubr.f32.gmra.mrb[0].mxu0 %v502
        %v1013 = vpop.f32.mrb[0].mxu0
        %v1014 = vadd.f32 %v789, %v1013
        %v1015 = vpop.f32.mrb[0].mxu0
        %1016 = vmatprep.mubr.f32.mxu0 %v507
        %1017 = vmatmul.mubr.f32.gmra.mrb[0].mxu0 %v506
        %v1018 = vpop.f32.mrb[0].mxu0
        %v1019 = vadd.f32 %v794, %v1018
        %v1020 = vpop.f32.mrb[0].mxu0
        %1021 = vdwg.mxu0
        %v1022 = vadd.f32 %v348, %v864
        %v1023 = vadd.f32 %v349, %v869
        %v1024 = vadd.f32 %v350, %v874
        %v1025 = vadd.f32 %v351, %v879
        %v1026 = vadd.f32 %v352, %v884
        %v1027 = vadd.f32 %v353, %v889
        %v1028 = vadd.f32 %v354, %v894
        %v1029 = vadd.f32 %v355, %v899
        %v1030 = vadd.f32 %v356, %v904
        %v1031 = vadd.f32 %v357, %v909
        %v1032 = vadd.f32 %v358, %v914
        %v1033 = vadd.f32 %v359, %v919
        %v1034 = vadd.f32 %v360, %v924
        %v1035 = vadd.f32 %v361, %v929
        %v1036 = vadd.f32 %v362, %v934
        %v1037 = vadd.f32 %v363, %v939
        %v1038 = vadd.f32 %v364, %v944
        %v1039 = vadd.f32 %v365, %v949
        %v1040 = vadd.f32 %v366, %v954
        %v1041 = vadd.f32 %v367, %v959
        %v1042 = vadd.f32 %v368, %v964
        %v1043 = vadd.f32 %v369, %v969
        %v1044 = vadd.f32 %v370, %v974
        %v1045 = vadd.f32 %v371, %v979
        %v1046 = vadd.f32 %v372, %v984
        %v1047 = vadd.f32 %v373, %v989
        %v1048 = vadd.f32 %v374, %v994
        %v1049 = vadd.f32 %v375, %v999
        %v1050 = vadd.f32 %v376, %v1004
        %v1051 = vadd.f32 %v377, %v1009
        %v1052 = vadd.f32 %v378, %v1014
        %v1053 = vadd.f32 %v379, %v1019
        %1054 = vst [vmem:[#allocation2] sm:$0xff] %v1022
        %1055 = vst [vmem:[#allocation2 + $0x8] sm:$0xff] %v1023
        %1056 = vst [vmem:[#allocation2 + $0x10] sm:$0xff] %v1024
        %1057 = vst [vmem:[#allocation2 + $0x18] sm:$0xff] %v1025
        %1058 = vst [vmem:[#allocation2 + $0x20] sm:$0xff] %v1026
        %1059 = vst [vmem:[#allocation2 + $0x28] sm:$0xff] %v1027
        %1060 = vst [vmem:[#allocation2 + $0x30] sm:$0xff] %v1028
        %1061 = vst [vmem:[#allocation2 + $0x38] sm:$0xff] %v1029
        %1062 = vst [vmem:[#allocation2 + $0x40] sm:$0xff] %v1030
        %1063 = vst [vmem:[#allocation2 + $0x48] sm:$0xff] %v1031
        %1064 = vst [vmem:[#allocation2 + $0x50] sm:$0xff] %v1032
        %1065 = vst [vmem:[#allocation2 + $0x58] sm:$0xff] %v1033
        %1066 = vst [vmem:[#allocation2 + $0x60] sm:$0xff] %v1034
        %1067 = vst [vmem:[#allocation2 + $0x68] sm:$0xff] %v1035
        %1068 = vst [vmem:[#allocation2 + $0x70] sm:$0xff] %v1036
        %1069 = vst [vmem:[#allocation2 + $0x78] sm:$0xff] %v1037
        %1070 = vst [vmem:[#allocation2 + $0x80] sm:$0xff] %v1038
        %1071 = vst [vmem:[#allocation2 + $0x88] sm:$0xff] %v1039
        %1072 = vst [vmem:[#allocation2 + $0x90] sm:$0xff] %v1040
        %1073 = vst [vmem:[#allocation2 + $0x98] sm:$0xff] %v1041
        %1074 = vst [vmem:[#allocation2 + $0xa0] sm:$0xff] %v1042
        %1075 = vst [vmem:[#allocation2 + $0xa8] sm:$0xff] %v1043
        %1076 = vst [vmem:[#allocation2 + $0xb0] sm:$0xff] %v1044
        %1077 = vst [vmem:[#allocation2 + $0xb8] sm:$0xff] %v1045
        %1078 = vst [vmem:[#allocation2 + $0xc0] sm:$0xff] %v1046
        %1079 = vst [vmem:[#allocation2 + $0xc8] sm:$0xff] %v1047
        %1080 = vst [vmem:[#allocation2 + $0xd0] sm:$0xff] %v1048
        %1081 = vst [vmem:[#allocation2 + $0xd8] sm:$0xff] %v1049
        %1082 = vst [vmem:[#allocation2 + $0xe0] sm:$0xff] %v1050
        %1083 = vst [vmem:[#allocation2 + $0xe8] sm:$0xff] %v1051
        %1084 = vst [vmem:[#allocation2 + $0xf0] sm:$0xff] %v1052
        %1085 = vst [vmem:[#allocation2 + $0xf8] sm:$0xff] %v1053
        // Predicated region
        $region57: #{tpu_custom_call.1} parent=35 // pred_check
          %p1086 = pneg %p312
        $region58: #{tpu_custom_call.1} parent=35 // pred_check_branch
          %1088 = sbr.rel (%p1086) target = $region60
        $region59: #{tpu_custom_call.1} parent=35 // pred_region
          %v1089 = vld [vmem:[#allocation2] sm:$0xff]
          %v1090 = vld [vmem:[#allocation2 + $0x8] sm:$0xff]
          %v1091 = vld [vmem:[#allocation2 + $0x10] sm:$0xff]
          %v1092 = vld [vmem:[#allocation2 + $0x18] sm:$0xff]
          %v1093 = vld [vmem:[#allocation2 + $0x20] sm:$0xff]
          %v1094 = vld [vmem:[#allocation2 + $0x28] sm:$0xff]
          %v1095 = vld [vmem:[#allocation2 + $0x30] sm:$0xff]
          %v1096 = vld [vmem:[#allocation2 + $0x38] sm:$0xff]
          %v1097 = vld [vmem:[#allocation2 + $0x40] sm:$0xff]
          %v1098 = vld [vmem:[#allocation2 + $0x48] sm:$0xff]
          %v1099 = vld [vmem:[#allocation2 + $0x50] sm:$0xff]
          %v1100 = vld [vmem:[#allocation2 + $0x58] sm:$0xff]
          %v1101 = vld [vmem:[#allocation2 + $0x60] sm:$0xff]
          %v1102 = vld [vmem:[#allocation2 + $0x68] sm:$0xff]
          %v1103 = vld [vmem:[#allocation2 + $0x70] sm:$0xff]
          %v1104 = vld [vmem:[#allocation2 + $0x78] sm:$0xff]
          %v1105 = vld [vmem:[#allocation2 + $0x80] sm:$0xff]
          %v1106 = vld [vmem:[#allocation2 + $0x88] sm:$0xff]
          %v1107 = vld [vmem:[#allocation2 + $0x90] sm:$0xff]
          %v1108 = vld [vmem:[#allocation2 + $0x98] sm:$0xff]
          %v1109 = vld [vmem:[#allocation2 + $0xa0] sm:$0xff]
          %v1110 = vld [vmem:[#allocation2 + $0xa8] sm:$0xff]
          %v1111 = vld [vmem:[#allocation2 + $0xb0] sm:$0xff]
          %v1112 = vld [vmem:[#allocation2 + $0xb8] sm:$0xff]
          %v1113 = vld [vmem:[#allocation2 + $0xc0] sm:$0xff]
          %v1114 = vld [vmem:[#allocation2 + $0xc8] sm:$0xff]
          %v1115 = vld [vmem:[#allocation2 + $0xd0] sm:$0xff]
          %v1116 = vld [vmem:[#allocation2 + $0xd8] sm:$0xff]
          %v1117 = vld [vmem:[#allocation2 + $0xe0] sm:$0xff]
          %v1118 = vld [vmem:[#allocation2 + $0xe8] sm:$0xff]
          %v1119 = vld [vmem:[#allocation2 + $0xf0] sm:$0xff]
          %v1120 = vld [vmem:[#allocation2 + $0xf8] sm:$0xff]
          %v1121 = vmul.f32 %v1089, 0.9
          %v1122 = vmul.f32 %v1090, 0.9
          %v1123 = vmul.f32 %v1091, 0.9
          %v1124 = vmul.f32 %v1092, 0.9
          %v1125 = vmul.f32 %v1093, 0.9
          %v1126 = vmul.f32 %v1094, 0.9
          %v1127 = vmul.f32 %v1095, 0.9
          %v1128 = vmul.f32 %v1096, 0.9
          %v1129 = vmul.f32 %v1097, 0.9
          %v1130 = vmul.f32 %v1098, 0.9
          %v1131 = vmul.f32 %v1099, 0.9
          %v1132 = vmul.f32 %v1100, 0.9
          %v1133 = vmul.f32 %v1101, 0.9
          %v1134 = vmul.f32 %v1102, 0.9
          %v1135 = vmul.f32 %v1103, 0.9
          %v1136 = vmul.f32 %v1104, 0.9
          %v1137 = vmul.f32 %v1105, 0.9
          %v1138 = vmul.f32 %v1106, 0.9
          %v1139 = vmul.f32 %v1107, 0.9
          %v1140 = vmul.f32 %v1108, 0.9
          %v1141 = vmul.f32 %v1109, 0.9
          %v1142 = vmul.f32 %v1110, 0.9
          %v1143 = vmul.f32 %v1111, 0.9
          %v1144 = vmul.f32 %v1112, 0.9
          %v1145 = vmul.f32 %v1113, 0.9
          %v1146 = vmul.f32 %v1114, 0.9
          %v1147 = vmul.f32 %v1115, 0.9
          %v1148 = vmul.f32 %v1116, 0.9
          %v1149 = vmul.f32 %v1117, 0.9
          %v1150 = vmul.f32 %v1118, 0.9
          %v1151 = vmul.f32 %v1119, 0.9
          %v1152 = vmul.f32 %v1120, 0.9
          %v1153 = vld [vmem:[%s273] sm:$0xff]
          %v1154 = vld [vmem:[%s273 + $0x8] sm:$0xff]
          %v1155 = vld [vmem:[%s273 + $0x10] sm:$0xff]
          %v1156 = vld [vmem:[%s273 + $0x18] sm:$0xff]
          %v1157 = vld [vmem:[%s273 + $0x20] sm:$0xff]
          %v1158 = vld [vmem:[%s273 + $0x28] sm:$0xff]
          %v1159 = vld [vmem:[%s273 + $0x30] sm:$0xff]
          %v1160 = vld [vmem:[%s273 + $0x38] sm:$0xff]
          %v1161 = vld [vmem:[%s273 + $0x40] sm:$0xff]
          %v1162 = vld [vmem:[%s273 + $0x48] sm:$0xff]
          %v1163 = vld [vmem:[%s273 + $0x50] sm:$0xff]
          %v1164 = vld [vmem:[%s273 + $0x58] sm:$0xff]
          %v1165 = vld [vmem:[%s273 + $0x60] sm:$0xff]
          %v1166 = vld [vmem:[%s273 + $0x68] sm:$0xff]
          %v1167 = vld [vmem:[%s273 + $0x70] sm:$0xff]
          %v1168 = vld [vmem:[%s273 + $0x78] sm:$0xff]
          %v1169 = vld [vmem:[%s273 + $0x80] sm:$0xff]
          %v1170 = vld [vmem:[%s273 + $0x88] sm:$0xff]
          %v1171 = vld [vmem:[%s273 + $0x90] sm:$0xff]
          %v1172 = vld [vmem:[%s273 + $0x98] sm:$0xff]
          %v1173 = vld [vmem:[%s273 + $0xa0] sm:$0xff]
          %v1174 = vld [vmem:[%s273 + $0xa8] sm:$0xff]
          %v1175 = vld [vmem:[%s273 + $0xb0] sm:$0xff]
          %v1176 = vld [vmem:[%s273 + $0xb8] sm:$0xff]
          %v1177 = vld [vmem:[%s273 + $0xc0] sm:$0xff]
          %v1178 = vld [vmem:[%s273 + $0xc8] sm:$0xff]
          %v1179 = vld [vmem:[%s273 + $0xd0] sm:$0xff]
          %v1180 = vld [vmem:[%s273 + $0xd8] sm:$0xff]
          %v1181 = vld [vmem:[%s273 + $0xe0] sm:$0xff]
          %v1182 = vld [vmem:[%s273 + $0xe8] sm:$0xff]
          %v1183 = vld [vmem:[%s273 + $0xf0] sm:$0xff]
          %v1184 = vld [vmem:[%s273 + $0xf8] sm:$0xff]
          %v1185 = vmul.f32 %v1153, 0.1
          %v1186 = vmul.f32 %v1154, 0.1
          %v1187 = vmul.f32 %v1155, 0.1
          %v1188 = vmul.f32 %v1156, 0.1
          %v1189 = vmul.f32 %v1157, 0.1
          %v1190 = vmul.f32 %v1158, 0.1
          %v1191 = vmul.f32 %v1159, 0.1
          %v1192 = vmul.f32 %v1160, 0.1
          %v1193 = vmul.f32 %v1161, 0.1
          %v1194 = vmul.f32 %v1162, 0.1
          %v1195 = vmul.f32 %v1163, 0.1
          %v1196 = vmul.f32 %v1164, 0.1
          %v1197 = vmul.f32 %v1165, 0.1
          %v1198 = vmul.f32 %v1166, 0.1
          %v1199 = vmul.f32 %v1167, 0.1
          %v1200 = vmul.f32 %v1168, 0.1
          %v1201 = vmul.f32 %v1169, 0.1
          %v1202 = vmul.f32 %v1170, 0.1
          %v1203 = vmul.f32 %v1171, 0.1
          %v1204 = vmul.f32 %v1172, 0.1
          %v1205 = vmul.f32 %v1173, 0.1
          %v1206 = vmul.f32 %v1174, 0.1
          %v1207 = vmul.f32 %v1175, 0.1
          %v1208 = vmul.f32 %v1176, 0.1
          %v1209 = vmul.f32 %v1177, 0.1
          %v1210 = vmul.f32 %v1178, 0.1
          %v1211 = vmul.f32 %v1179, 0.1
          %v1212 = vmul.f32 %v1180, 0.1
          %v1213 = vmul.f32 %v1181, 0.1
          %v1214 = vmul.f32 %v1182, 0.1
          %v1215 = vmul.f32 %v1183, 0.1
          %v1216 = vmul.f32 %v1184, 0.1
          %v1217 = vadd.f32 %v1121, %v1185
          %v1218 = vadd.f32 %v1122, %v1186
          %v1219 = vadd.f32 %v1123, %v1187
          %v1220 = vadd.f32 %v1124, %v1188
          %v1221 = vadd.f32 %v1125, %v1189
          %v1222 = vadd.f32 %v1126, %v1190
          %v1223 = vadd.f32 %v1127, %v1191
          %v1224 = vadd.f32 %v1128, %v1192
          %v1225 = vadd.f32 %v1129, %v1193
          %v1226 = vadd.f32 %v1130, %v1194
          %v1227 = vadd.f32 %v1131, %v1195
          %v1228 = vadd.f32 %v1132, %v1196
          %v1229 = vadd.f32 %v1133, %v1197
          %v1230 = vadd.f32 %v1134, %v1198
          %v1231 = vadd.f32 %v1135, %v1199
          %v1232 = vadd.f32 %v1136, %v1200
          %v1233 = vadd.f32 %v1137, %v1201
          %v1234 = vadd.f32 %v1138, %v1202
          %v1235 = vadd.f32 %v1139, %v1203
          %v1236 = vadd.f32 %v1140, %v1204
          %v1237 = vadd.f32 %v1141, %v1205
          %v1238 = vadd.f32 %v1142, %v1206
          %v1239 = vadd.f32 %v1143, %v1207
          %v1240 = vadd.f32 %v1144, %v1208
          %v1241 = vadd.f32 %v1145, %v1209
          %v1242 = vadd.f32 %v1146, %v1210
          %v1243 = vadd.f32 %v1147, %v1211
          %v1244 = vadd.f32 %v1148, %v1212
          %v1245 = vadd.f32 %v1149, %v1213
          %v1246 = vadd.f32 %v1150, %v1214
          %v1247 = vadd.f32 %v1151, %v1215
          %v1248 = vadd.f32 %v1152, %v1216
          %v1249 = vld [vmem:[#allocation9] sm:$0xff]
          %v1250 = vld [vmem:[#allocation9 + $0x8] sm:$0xff]
          %v1251 = vld [vmem:[#allocation9 + $0x10] sm:$0xff]
          %v1252 = vld [vmem:[#allocation9 + $0x18] sm:$0xff]
          %v1253 = vld [vmem:[#allocation9 + $0x20] sm:$0xff]
          %v1254 = vld [vmem:[#allocation9 + $0x28] sm:$0xff]
          %v1255 = vld [vmem:[#allocation9 + $0x30] sm:$0xff]
          %v1256 = vld [vmem:[#allocation9 + $0x38] sm:$0xff]
          %v1257 = vld [vmem:[#allocation9 + $0x40] sm:$0xff]
          %v1258 = vld [vmem:[#allocation9 + $0x48] sm:$0xff]
          %v1259 = vld [vmem:[#allocation9 + $0x50] sm:$0xff]
          %v1260 = vld [vmem:[#allocation9 + $0x58] sm:$0xff]
          %v1261 = vld [vmem:[#allocation9 + $0x60] sm:$0xff]
          %v1262 = vld [vmem:[#allocation9 + $0x68] sm:$0xff]
          %v1263 = vld [vmem:[#allocation9 + $0x70] sm:$0xff]
          %v1264 = vld [vmem:[#allocation9 + $0x78] sm:$0xff]
          %1265 = vmatprep.subr.mxu0 0.0
          %1266 = vmatpush1.msra.mxu0 %v1249
          %1267 = vmatprep.subr.mxu0 0.0
          %1268 = vmatpush1.msra.mxu0 %v1250
          %1269 = vmatprep.subr.mxu0 0.0
          %1270 = vmatpush1.msra.mxu0 %v1251
          %1271 = vmatprep.subr.mxu0 0.0
          %1272 = vmatpush1.msra.mxu0 %v1252
          %1273 = vmatprep.subr.mxu0 0.0
          %1274 = vmatpush1.msra.mxu0 %v1253
          %1275 = vmatprep.subr.mxu0 0.0
          %1276 = vmatpush1.msra.mxu0 %v1254
          %1277 = vmatprep.subr.mxu0 0.0
          %1278 = vmatpush1.msra.mxu0 %v1255
          %1279 = vmatprep.subr.mxu0 0.0
          %1280 = vmatpush1.msra.mxu0 %v1256
          %1281 = vmatprep.subr.mxu0 0.0
          %1282 = vmatpush1.msra.mxu0 %v1257
          %1283 = vmatprep.subr.mxu0 0.0
          %1284 = vmatpush1.msra.mxu0 %v1258
          %1285 = vmatprep.subr.mxu0 0.0
          %1286 = vmatpush1.msra.mxu0 %v1259
          %1287 = vmatprep.subr.mxu0 0.0
          %1288 = vmatpush1.msra.mxu0 %v1260
          %1289 = vmatprep.subr.mxu0 0.0
          %1290 = vmatpush1.msra.mxu0 %v1261
          %1291 = vmatprep.subr.mxu0 0.0
          %1292 = vmatpush1.msra.mxu0 %v1262
          %1293 = vmatprep.subr.mxu0 0.0
          %1294 = vmatpush1.msra.mxu0 %v1263
          %1295 = vmatprep.subr.mxu0 0.0
          %1296 = vmatpush1.msra.mxu0 %v1264
          %1297 = vmatprep.subr.mxu0 0.0
          %1298 = vmatpush1.msra.mxu0 0.0
          %1299 = vmatprep.subr.mxu0 0.0
          %1300 = vmatpush1.msra.mxu0 0.0
          %1301 = vmatprep.subr.mxu0 0.0
          %1302 = vmatpush1.msra.mxu0 0.0
          %1303 = vmatprep.subr.mxu0 0.0
          %1304 = vmatpush1.msra.mxu0 0.0
          %1305 = vmatprep.subr.mxu0 0.0
          %1306 = vmatpush1.msra.mxu0 0.0
          %1307 = vmatprep.subr.mxu0 0.0
          %1308 = vmatpush1.msra.mxu0 0.0
          %1309 = vmatprep.subr.mxu0 0.0
          %1310 = vmatpush1.msra.mxu0 0.0
          %1311 = vmatprep.subr.mxu0 0.0
          %1312 = vmatpush1.msra.mxu0 0.0
          %1313 = vmatprep.subr.mxu0 0.0
          %1314 = vmatpush1.msra.mxu0 0.0
          %1315 = vmatprep.subr.mxu0 0.0
          %1316 = vmatpush1.msra.mxu0 0.0
          %1317 = vmatprep.subr.mxu0 0.0
          %1318 = vmatpush1.msra.mxu0 0.0
          %1319 = vmatprep.subr.mxu0 0.0
          %1320 = vmatpush1.msra.mxu0 0.0
          %1321 = vmatprep.subr.mxu0 0.0
          %1322 = vmatpush1.msra.mxu0 0.0
          %1323 = vmatprep.subr.mxu0 0.0
          %1324 = vmatpush1.msra.mxu0 0.0
          %1325 = vmatprep.subr.mxu0 0.0
          %1326 = vmatpush1.msra.mxu0 0.0
          %1327 = vmatprep.subr.mxu0 0.0
          %1328 = vmatpush1.msra.mxu0 0.0
          %1329 = vmatprep.mubr.f32.mxu0 0.0
          %1330 = vmatmul.mubr.f32.gmra.mrb[0].mxu0 %v1217
          %v1331 = vpop.f32.mrb[0].mxu0
          %v1332 = vadd.f32 0.0, %v1331
          %v1333 = vpop.f32.mrb[0].mxu0
          %1334 = vmatprep.mubr.f32.mxu0 0.0
          %1335 = vmatmul.mubr.f32.gmra.mrb[0].mxu0 %v1218
          %v1336 = vpop.f32.mrb[0].mxu0
          %v1337 = vadd.f32 0.0, %v1336
          %v1338 = vpop.f32.mrb[0].mxu0
          %1339 = vmatprep.mubr.f32.mxu0 0.0
          %1340 = vmatmul.mubr.f32.gmra.mrb[0].mxu0 %v1219
          %v1341 = vpop.f32.mrb[0].mxu0
          %v1342 = vadd.f32 0.0, %v1341
          %v1343 = vpop.f32.mrb[0].mxu0
          %1344 = vmatprep.mubr.f32.mxu0 0.0
          %1345 = vmatmul.mubr.f32.gmra.mrb[0].mxu0 %v1220
          %v1346 = vpop.f32.mrb[0].mxu0
          %v1347 = vadd.f32 0.0, %v1346
          %v1348 = vpop.f32.mrb[0].mxu0
          %1349 = vmatprep.mubr.f32.mxu0 0.0
          %1350 = vmatmul.mubr.f32.gmra.mrb[0].mxu0 %v1221
          %v1351 = vpop.f32.mrb[0].mxu0
          %v1352 = vadd.f32 0.0, %v1351
          %v1353 = vpop.f32.mrb[0].mxu0
          %1354 = vmatprep.mubr.f32.mxu0 0.0
          %1355 = vmatmul.mubr.f32.gmra.mrb[0].mxu0 %v1222
          %v1356 = vpop.f32.mrb[0].mxu0
          %v1357 = vadd.f32 0.0, %v1356
          %v1358 = vpop.f32.mrb[0].mxu0
          %1359 = vmatprep.mubr.f32.mxu0 0.0
          %1360 = vmatmul.mubr.f32.gmra.mrb[0].mxu0 %v1223
          %v1361 = vpop.f32.mrb[0].mxu0
          %v1362 = vadd.f32 0.0, %v1361
          %v1363 = vpop.f32.mrb[0].mxu0
          %1364 = vmatprep.mubr.f32.mxu0 0.0
          %1365 = vmatmul.mubr.f32.gmra.mrb[0].mxu0 %v1224
          %v1366 = vpop.f32.mrb[0].mxu0
          %v1367 = vadd.f32 0.0, %v1366
          %v1368 = vpop.f32.mrb[0].mxu0
          %1369 = vmatprep.mubr.f32.mxu0 0.0
          %1370 = vmatmul.mubr.f32.gmra.mrb[0].mxu0 %v1225
          %v1371 = vpop.f32.mrb[0].mxu0
          %v1372 = vadd.f32 0.0, %v1371
          %v1373 = vpop.f32.mrb[0].mxu0
          %1374 = vmatprep.mubr.f32.mxu0 0.0
          %1375 = vmatmul.mubr.f32.gmra.mrb[0].mxu0 %v1226
          %v1376 = vpop.f32.mrb[0].mxu0
          %v1377 = vadd.f32 0.0, %v1376
          %v1378 = vpop.f32.mrb[0].mxu0
          %1379 = vmatprep.mubr.f32.mxu0 0.0
          %1380 = vmatmul.mubr.f32.gmra.mrb[0].mxu0 %v1227
          %v1381 = vpop.f32.mrb[0].mxu0
          %v1382 = vadd.f32 0.0, %v1381
          %v1383 = vpop.f32.mrb[0].mxu0
          %1384 = vmatprep.mubr.f32.mxu0 0.0
          %1385 = vmatmul.mubr.f32.gmra.mrb[0].mxu0 %v1228
          %v1386 = vpop.f32.mrb[0].mxu0
          %v1387 = vadd.f32 0.0, %v1386
          %v1388 = vpop.f32.mrb[0].mxu0
          %1389 = vmatprep.mubr.f32.mxu0 0.0
          %1390 = vmatmul.mubr.f32.gmra.mrb[0].mxu0 %v1229
          %v1391 = vpop.f32.mrb[0].mxu0
          %v1392 = vadd.f32 0.0, %v1391
          %v1393 = vpop.f32.mrb[0].mxu0
          %1394 = vmatprep.mubr.f32.mxu0 0.0
          %1395 = vmatmul.mubr.f32.gmra.mrb[0].mxu0 %v1230
          %v1396 = vpop.f32.mrb[0].mxu0
          %v1397 = vadd.f32 0.0, %v1396
          %v1398 = vpop.f32.mrb[0].mxu0
          %1399 = vmatprep.mubr.f32.mxu0 0.0
          %1400 = vmatmul.mubr.f32.gmra.mrb[0].mxu0 %v1231
          %v1401 = vpop.f32.mrb[0].mxu0
          %v1402 = vadd.f32 0.0, %v1401
          %v1403 = vpop.f32.mrb[0].mxu0
          %1404 = vmatprep.mubr.f32.mxu0 0.0
          %1405 = vmatmul.mubr.f32.gmra.mrb[0].mxu0 %v1232
          %v1406 = vpop.f32.mrb[0].mxu0
          %v1407 = vadd.f32 0.0, %v1406
          %v1408 = vpop.f32.mrb[0].mxu0
          %1409 = vmatprep.mubr.f32.mxu0 0.0
          %1410 = vmatmul.mubr.f32.gmra.mrb[0].mxu0 %v1233
          %v1411 = vpop.f32.mrb[0].mxu0
          %v1412 = vadd.f32 0.0, %v1411
          %v1413 = vpop.f32.mrb[0].mxu0
          %1414 = vmatprep.mubr.f32.mxu0 0.0
          %1415 = vmatmul.mubr.f32.gmra.mrb[0].mxu0 %v1234
          %v1416 = vpop.f32.mrb[0].mxu0
          %v1417 = vadd.f32 0.0, %v1416
          %v1418 = vpop.f32.mrb[0].mxu0
          %1419 = vmatprep.mubr.f32.mxu0 0.0
          %1420 = vmatmul.mubr.f32.gmra.mrb[0].mxu0 %v1235
          %v1421 = vpop.f32.mrb[0].mxu0
          %v1422 = vadd.f32 0.0, %v1421
          %v1423 = vpop.f32.mrb[0].mxu0
          %1424 = vmatprep.mubr.f32.mxu0 0.0
          %1425 = vmatmul.mubr.f32.gmra.mrb[0].mxu0 %v1236
          %v1426 = vpop.f32.mrb[0].mxu0
          %v1427 = vadd.f32 0.0, %v1426
          %v1428 = vpop.f32.mrb[0].mxu0
          %1429 = vmatprep.mubr.f32.mxu0 0.0
          %1430 = vmatmul.mubr.f32.gmra.mrb[0].mxu0 %v1237
          %v1431 = vpop.f32.mrb[0].mxu0
          %v1432 = vadd.f32 0.0, %v1431
          %v1433 = vpop.f32.mrb[0].mxu0
          %1434 = vmatprep.mubr.f32.mxu0 0.0
          %1435 = vmatmul.mubr.f32.gmra.mrb[0].mxu0 %v1238
          %v1436 = vpop.f32.mrb[0].mxu0
          %v1437 = vadd.f32 0.0, %v1436
          %v1438 = vpop.f32.mrb[0].mxu0
          %1439 = vmatprep.mubr.f32.mxu0 0.0
          %1440 = vmatmul.mubr.f32.gmra.mrb[0].mxu0 %v1239
          %v1441 = vpop.f32.mrb[0].mxu0
          %v1442 = vadd.f32 0.0, %v1441
          %v1443 = vpop.f32.mrb[0].mxu0
          %1444 = vmatprep.mubr.f32.mxu0 0.0
          %1445 = vmatmul.mubr.f32.gmra.mrb[0].mxu0 %v1240
          %v1446 = vpop.f32.mrb[0].mxu0
          %v1447 = vadd.f32 0.0, %v1446
          %v1448 = vpop.f32.mrb[0].mxu0
          %1449 = vmatprep.mubr.f32.mxu0 0.0
          %1450 = vmatmul.mubr.f32.gmra.mrb[0].mxu0 %v1241
          %v1451 = vpop.f32.mrb[0].mxu0
          %v1452 = vadd.f32 0.0, %v1451
          %v1453 = vpop.f32.mrb[0].mxu0
          %1454 = vmatprep.mubr.f32.mxu0 0.0
          %1455 = vmatmul.mubr.f32.gmra.mrb[0].mxu0 %v1242
          %v1456 = vpop.f32.mrb[0].mxu0
          %v1457 = vadd.f32 0.0, %v1456
          %v1458 = vpop.f32.mrb[0].mxu0
          %1459 = vmatprep.mubr.f32.mxu0 0.0
          %1460 = vmatmul.mubr.f32.gmra.mrb[0].mxu0 %v1243
          %v1461 = vpop.f32.mrb[0].mxu0
          %v1462 = vadd.f32 0.0, %v1461
          %v1463 = vpop.f32.mrb[0].mxu0
          %1464 = vmatprep.mubr.f32.mxu0 0.0
          %1465 = vmatmul.mubr.f32.gmra.mrb[0].mxu0 %v1244
          %v1466 = vpop.f32.mrb[0].mxu0
          %v1467 = vadd.f32 0.0, %v1466
          %v1468 = vpop.f32.mrb[0].mxu0
          %1469 = vmatprep.mubr.f32.mxu0 0.0
          %1470 = vmatmul.mubr.f32.gmra.mrb[0].mxu0 %v1245
          %v1471 = vpop.f32.mrb[0].mxu0
          %v1472 = vadd.f32 0.0, %v1471
          %v1473 = vpop.f32.mrb[0].mxu0
          %1474 = vmatprep.mubr.f32.mxu0 0.0
          %1475 = vmatmul.mubr.f32.gmra.mrb[0].mxu0 %v1246
          %v1476 = vpop.f32.mrb[0].mxu0
          %v1477 = vadd.f32 0.0, %v1476
          %v1478 = vpop.f32.mrb[0].mxu0
          %1479 = vmatprep.mubr.f32.mxu0 0.0
          %1480 = vmatmul.mubr.f32.gmra.mrb[0].mxu0 %v1247
          %v1481 = vpop.f32.mrb[0].mxu0
          %v1482 = vadd.f32 0.0, %v1481
          %v1483 = vpop.f32.mrb[0].mxu0
          %1484 = vmatprep.mubr.f32.mxu0 0.0
          %1485 = vmatmul.mubr.f32.gmra.mrb[0].mxu0 %v1248
          %v1486 = vpop.f32.mrb[0].mxu0
          %v1487 = vadd.f32 0.0, %v1486
          %v1488 = vpop.f32.mrb[0].mxu0
          %1489 = vdwg.mxu0
          %1490 = vst [vmem:[%s306] sm:$0xff] %v1332
          %1491 = vst [vmem:[%s306 + $0x8] sm:$0xff] %v1337
          %1492 = vst [vmem:[%s306 + $0x10] sm:$0xff] %v1342
          %1493 = vst [vmem:[%s306 + $0x18] sm:$0xff] %v1347
          %1494 = vst [vmem:[%s306 + $0x20] sm:$0xff] %v1352
          %1495 = vst [vmem:[%s306 + $0x28] sm:$0xff] %v1357
          %1496 = vst [vmem:[%s306 + $0x30] sm:$0xff] %v1362
          %1497 = vst [vmem:[%s306 + $0x38] sm:$0xff] %v1367
          %1498 = vst [vmem:[%s306 + $0x40] sm:$0xff] %v1372
          %1499 = vst [vmem:[%s306 + $0x48] sm:$0xff] %v1377
          %1500 = vst [vmem:[%s306 + $0x50] sm:$0xff] %v1382
          %1501 = vst [vmem:[%s306 + $0x58] sm:$0xff] %v1387
          %1502 = vst [vmem:[%s306 + $0x60] sm:$0xff] %v1392
          %1503 = vst [vmem:[%s306 + $0x68] sm:$0xff] %v1397
          %1504 = vst [vmem:[%s306 + $0x70] sm:$0xff] %v1402
          %1505 = vst [vmem:[%s306 + $0x78] sm:$0xff] %v1407
          %1506 = vst [vmem:[%s306 + $0x80] sm:$0xff] %v1412
          %1507 = vst [vmem:[%s306 + $0x88] sm:$0xff] %v1417
          %1508 = vst [vmem:[%s306 + $0x90] sm:$0xff] %v1422
          %1509 = vst [vmem:[%s306 + $0x98] sm:$0xff] %v1427
          %1510 = vst [vmem:[%s306 + $0xa0] sm:$0xff] %v1432
          %1511 = vst [vmem:[%s306 + $0xa8] sm:$0xff] %v1437
          %1512 = vst [vmem:[%s306 + $0xb0] sm:$0xff] %v1442
          %1513 = vst [vmem:[%s306 + $0xb8] sm:$0xff] %v1447
          %1514 = vst [vmem:[%s306 + $0xc0] sm:$0xff] %v1452
          %1515 = vst [vmem:[%s306 + $0xc8] sm:$0xff] %v1457
          %1516 = vst [vmem:[%s306 + $0xd0] sm:$0xff] %v1462
          %1517 = vst [vmem:[%s306 + $0xd8] sm:$0xff] %v1467
          %1518 = vst [vmem:[%s306 + $0xe0] sm:$0xff] %v1472
          %1519 = vst [vmem:[%s306 + $0xe8] sm:$0xff] %v1477
          %1520 = vst [vmem:[%s306 + $0xf0] sm:$0xff] %v1482
          %1521 = vst [vmem:[%s306 + $0xf8] sm:$0xff] %v1487
        $region60: #{tpu_custom_call.1} parent=35 // pred_fallthru
          _
        %s1522 = sand.u32 %s143, 1
        %s1523 = scalar_lea.sflag [#allocation5], %s1522
        %s1524 = sand.u32 %s143, 1
        %s1525 = smul.addr %s1524, 256
        %s1526 = scalar_lea.vmem [#allocation10], %s1525
        // Predicated region
        $region61: #{tpu_custom_call.1} parent=35 // pred_check
          %p1527 = pneg %p153
        $region62: #{tpu_custom_call.1} parent=35 // pred_check_branch
          %1529 = sbr.rel (%p1527) target = $region64
        $region63: #{tpu_custom_call.1} parent=35 // pred_region
          %s1530 = smul.u32 32, %s26
          %s1532 = ssub.s32 4096, 4096
          %1533 = vsyncadd %s1523, %s1532
          %s1534 = smul.addr %s1530, 128
          %s1535 = scalar_lea.hbm %s4, %s1534
          %s1536 = sshll.u32 %s1526, 4
          %s1537 = int_to_ptr.vmem [resolvable:$true] %s1536
          %1542 = dma.vmem_to_hbm [thread:$0]  %s1537, 4096, %s1535, %s1523, 128, 128, 8
        $region64: #{tpu_custom_call.1} parent=35 // pred_fallthru
          _
      $region36: #{tpu_custom_call.1} parent=5 // pred_fallthru
        _
      %p1543 = scmp.le.s32.totalorder 2, %s17
      // Predicated region
      $region65: #{tpu_custom_call.1} parent=5 // pred_check
        %p1544 = pneg %p1543
      $region66: #{tpu_custom_call.1} parent=5 // pred_check_branch
        %1546 = sbr.rel (%p1544) target = $region68
      $region67: #{tpu_custom_call.1} parent=5 // pred_region
        %s1547 = ssub.s32 %s17, 2
        // Predicated region
        $region69: #{tpu_custom_call.1} parent=67 // pred_check
          %p1548 = pneg %p159
        $region70: #{tpu_custom_call.1} parent=67 // pred_check_branch
          %1550 = sbr.rel (%p1548) target = $region72
        $region71: #{tpu_custom_call.1} parent=67 // pred_region
          %s1551 = sand.u32 %s144, 1
          %s1552 = scalar_lea.sflag [#allocation5], %s1551
          %s1553 = sand.u32 %s144, 1
          %s1554 = smul.addr %s1553, 256
          %s1555 = scalar_lea.vmem [#allocation10], %s1554
          %1556 = dma.done %s1552, 4096
        $region72: #{tpu_custom_call.1} parent=67 // pred_fallthru
          _
      $region68: #{tpu_custom_call.1} parent=5 // pred_fallthru
        _
    $region6: #{tpu_custom_call.1} parent=1 // loop_footer
      %s21 = sadd.s32 1, %s17
    $region7: #{tpu_custom_call.1} parent=1 // loop_footer_branch
      %16 = sbr.rel target = $region3
    $region8: #{tpu_custom_call.1} parent=1 // loop_exit
      _
    %1557 = vsyncpa [#allocation4], 1
    %s1558 = scalar_lea.sflag [#allocation4], 1
    %1559 = vsyncpa %s1558, 1
    %1560 = vsyncpa [#allocation7], 1
    %1561 = vsyncpa [#allocation5], 1
    %s1562 = scalar_lea.sflag [#allocation5], 1
    %1563 = vsyncpa %s1562, 1

</llo_original>
